<compile_context>
chip_gen: v7x
topology: tpu7x:2x2x1
jax: 0.10.0
libtpu: 0.0.40
codegen_flags: <defaults>
</compile_context>

<pallas_src>
import functools
import math

import jax
import jax.numpy as jnp
from jax.experimental import pallas as pl
from jax.experimental.pallas import tpu as pltpu


def _round_up(x, m):
    return ((x + m - 1) // m) * m


# ----------------------------------------------------------------------------
# Kernel 1: tiled matmul + bias (used for qkv_proj and o_proj)
# ----------------------------------------------------------------------------
def _matmul_bias_kernel(x_ref, w_ref, b_ref, o_ref, acc_ref):
    @pl.when(pl.program_id(2) == 0)
    def _():
        acc_ref[...] = jnp.zeros_like(acc_ref)

    acc_ref[...] += jnp.dot(
        x_ref[...], w_ref[...], preferred_element_type=jnp.float32
    )

    @pl.when(pl.program_id(2) == pl.num_programs(2) - 1)
    def _():
        o_ref[...] = (acc_ref[...] + b_ref[...].astype(jnp.float32)).astype(
            o_ref.dtype
        )


def matmul_bias(x, w, b, *, tm=256, tn=512, tk=512):
    """out = x @ w + b, with padding to hardware-friendly tiles."""
    M, K = x.shape
    K2, N = w.shape
    assert K == K2 and b.shape == (N,)
    tm = min(tm, _round_up(M, 8))
    tn = min(tn, _round_up(N, 128))
    tk = min(tk, _round_up(K, 128))
    Mp, Np, Kp = _round_up(M, tm), _round_up(N, tn), _round_up(K, tk)

    xp = jnp.pad(x, ((0, Mp - M), (0, Kp - K)))
    wp = jnp.pad(w, ((0, Kp - K), (0, Np - N)))
    bp = jnp.pad(b, ((0, Np - N),)).reshape(1, Np)

    out = pl.pallas_call(
        _matmul_bias_kernel,
        out_shape=jax.ShapeDtypeStruct((Mp, Np), x.dtype),
        grid_spec=pltpu.PrefetchScalarGridSpec(
            num_scalar_prefetch=0,
            grid=(Mp // tm, Np // tn, Kp // tk),
            in_specs=[
                pl.BlockSpec((tm, tk), lambda i, j, k: (i, k)),
                pl.BlockSpec((tk, tn), lambda i, j, k: (k, j)),
                pl.BlockSpec((1, tn), lambda i, j, k: (0, j)),
            ],
            out_specs=pl.BlockSpec((tm, tn), lambda i, j, k: (i, j)),
            scratch_shapes=[pltpu.VMEM((tm, tn), jnp.float32)],
        ),
        compiler_params=pltpu.CompilerParams(
            dimension_semantics=("parallel", "parallel", "arbitrary")
        ),
    )(xp, wp, bp)
    return out[:M, :N]


# ----------------------------------------------------------------------------
# Kernel 2: flash attention with fused RoPE on q and k
# ----------------------------------------------------------------------------
def _rope_flash_attn_kernel(
    q_ref, k_ref, v_ref, cosq_ref, sinq_ref, cosk_ref, sink_ref, bias_ref,
    o_ref, m_sc, l_sc, acc_sc, *, sm_scale
):
    ki = pl.program_id(2)

    @pl.when(ki == 0)
    def _():
        m_sc[...] = jnp.full_like(m_sc, -jnp.inf)
        l_sc[...] = jnp.zeros_like(l_sc)
        acc_sc[...] = jnp.zeros_like(acc_sc)

    def rope(x, cos, sin):
        d = x.shape[-1]
        x1 = x[..., : d // 2]
        x2 = x[..., d // 2:]
        rot = jnp.concatenate([-x2, x1], axis=-1)
        return x * cos + rot * sin

    q = rope(
        q_ref[...].astype(jnp.float32),
        cosq_ref[...][None].astype(jnp.float32),
        sinq_ref[...][None].astype(jnp.float32),
    )
    k = rope(
        k_ref[...].astype(jnp.float32),
        cosk_ref[...][None].astype(jnp.float32),
        sink_ref[...][None].astype(jnp.float32),
    )
    v = v_ref[...]

    s = jnp.einsum("bqd,bkd->bqk", q, k, preferred_element_type=jnp.float32)
    s = s * sm_scale + bias_ref[...].astype(jnp.float32)

    m_new = jnp.maximum(m_sc[...], s.max(-1, keepdims=True))
    alpha = jnp.exp(m_sc[...] - m_new)
    p = jnp.exp(s - m_new)
    l_sc[...] = alpha * l_sc[...] + p.sum(-1, keepdims=True)
    acc_sc[...] = alpha * acc_sc[...] + jnp.einsum(
        "bqk,bkd->bqd", p.astype(v.dtype), v, preferred_element_type=jnp.float32
    )
    m_sc[...] = m_new

    @pl.when(ki == pl.num_programs(2) - 1)
    def _():
        o_ref[...] = (acc_sc[...] / l_sc[...]).astype(o_ref.dtype)


def rope_flash_attention(q, k, v, cos, sin, bias, *, sm_scale, tq=256, tkv=256):
    """q,k,v: (BH, L, D); cos/sin: (L, D); bias: (BH, L, L)."""
    BH, L, D = q.shape
    tq = min(tq, _round_up(L, 8))
    tkv = min(tkv, _round_up(L, 8))
    Lq = _round_up(L, tq)
    Lk = _round_up(L, tkv)

    qp = jnp.pad(q, ((0, 0), (0, Lq - L), (0, 0)))
    kp = jnp.pad(k, ((0, 0), (0, Lk - L), (0, 0)))
    vp = jnp.pad(v, ((0, 0), (0, Lk - L), (0, 0)))
    cq = jnp.pad(cos, ((0, Lq - L), (0, 0)))
    sq = jnp.pad(sin, ((0, Lq - L), (0, 0)))
    ck = jnp.pad(cos, ((0, Lk - L), (0, 0)))
    sk = jnp.pad(sin, ((0, Lk - L), (0, 0)))
    # Padded kv positions get a large negative bias so they vanish in softmax.
    bp = jnp.pad(bias, ((0, 0), (0, Lq - L), (0, Lk - L)), constant_values=-1e30)

    out = pl.pallas_call(
        functools.partial(_rope_flash_attn_kernel, sm_scale=sm_scale),
        out_shape=jax.ShapeDtypeStruct((BH, Lq, D), q.dtype),
        grid_spec=pltpu.PrefetchScalarGridSpec(
            num_scalar_prefetch=0,
            grid=(BH, Lq // tq, Lk // tkv),
            in_specs=[
                pl.BlockSpec((1, tq, D), lambda b, qi, ki: (b, qi, 0)),   # q
                pl.BlockSpec((1, tkv, D), lambda b, qi, ki: (b, ki, 0)),  # k
                pl.BlockSpec((1, tkv, D), lambda b, qi, ki: (b, ki, 0)),  # v
                pl.BlockSpec((tq, D), lambda b, qi, ki: (qi, 0)),         # cos_q
                pl.BlockSpec((tq, D), lambda b, qi, ki: (qi, 0)),         # sin_q
                pl.BlockSpec((tkv, D), lambda b, qi, ki: (ki, 0)),        # cos_k
                pl.BlockSpec((tkv, D), lambda b, qi, ki: (ki, 0)),        # sin_k
                pl.BlockSpec((1, tq, tkv), lambda b, qi, ki: (b, qi, ki)),  # bias
            ],
            out_specs=pl.BlockSpec((1, tq, D), lambda b, qi, ki: (b, qi, 0)),
            scratch_shapes=[
                pltpu.VMEM((1, tq, 1), jnp.float32),
                pltpu.VMEM((1, tq, 1), jnp.float32),
                pltpu.VMEM((1, tq, D), jnp.float32),
            ],
        ),
        compiler_params=pltpu.CompilerParams(
            dimension_semantics=("parallel", "parallel", "arbitrary")
        ),
    )(qp, kp, vp, cq, sq, ck, sk, bp)
    return out[:, :L, :]


# ----------------------------------------------------------------------------
# RoPE cos/sin cache: tiny, so plain JAX glue (fused rotation happens in the
# attention kernel — no separate pallas_call, per the performance review).
# ----------------------------------------------------------------------------
def rope_cos_sin(seq_len, dim, base=10000.0, dtype=jnp.float32):
    inv_freq = 1.0 / (base ** (jnp.arange(0, dim, 2, dtype=jnp.float32) / dim))
    t = jnp.arange(seq_len, dtype=jnp.float32)
    freqs = jnp.einsum("i,j->ij", t, inv_freq)
    emb = jnp.concatenate([freqs, freqs], axis=-1)
    return jnp.cos(emb).astype(dtype), jnp.sin(emb).astype(dtype)


# ----------------------------------------------------------------------------
# NewAttention.forward (pack_qkv=True, rope, no dropout, no padding_inputs)
# ----------------------------------------------------------------------------
@functools.partial(jax.jit, static_argnames=("num_heads",))
def new_attention_forward(
    hidden_states, wqkv, bqkv, wo, bo, cos, sin, attention_bias, *, num_heads
):
    B, L, hidden = hidden_states.shape
    assert hidden % num_heads == 0
    D = hidden // num_heads
    assert D % 2 == 0

    # qkv projection (Pallas matmul kernel), then split/reshape (layout glue).
    x2d = hidden_states.reshape(B * L, hidden)
    qkv = matmul_bias(x2d, wqkv, bqkv)                  # (B*L, 3*hidden)
    qkv = qkv.reshape(B, L, 3, num_heads, D)
    q = qkv[:, :, 0].transpose(0, 2, 1, 3).reshape(B * num_heads, L, D)
    k = qkv[:, :, 1].transpose(0, 2, 1, 3).reshape(B * num_heads, L, D)
    v = qkv[:, :, 2].transpose(0, 2, 1, 3).reshape(B * num_heads, L, D)

    bias_full = (
        jnp.broadcast_to(attention_bias, (B, num_heads, L, L))
        .reshape(B * num_heads, L, L)
        .astype(jnp.float32)
    )

    ctx = rope_flash_attention(
        q, k, v, cos.astype(jnp.float32), sin.astype(jnp.float32), bias_full,
        sm_scale=1.0 / math.sqrt(D),
    )
    ctx = ctx.reshape(B, num_heads, L, D).transpose(0, 2, 1, 3).reshape(B * L, hidden)

    out = matmul_bias(ctx, wo, bo)                      # o_proj
    return out.reshape(B, L, hidden)


# ----------------------------------------------------------------------------
# Pure-JAX reference (mirrors the PyTorch forward) + self-check
# ----------------------------------------------------------------------------
def _reference_forward(hidden_states, wqkv, bqkv, wo, bo, cos, sin, bias, num_heads):
    B, L, hidden = hidden_states.shape
    D = hidden // num_heads
    hp = jax.lax.Precision.HIGHEST
    qkv = jnp.dot(hidden_states, wqkv, precision=hp) + bqkv
    q, k, v = jnp.split(qkv, 3, axis=-1)
    q = q.reshape(B, L, num_heads, D)
    k = k.reshape(B, L, num_heads, D)
    v = v.reshape(B, L, num_heads, D)

    c = cos[None, :, None, :]
    s = sin[None, :, None, :]

    def rot(x):
        x1, x2 = x[..., : D // 2], x[..., D // 2:]
        return jnp.concatenate([-x2, x1], axis=-1)

    q = q * c + rot(q) * s
    k = k * c + rot(k) * s

    q = q.transpose(0, 2, 1, 3)
    k = k.transpose(0, 2, 1, 3)
    v = v.transpose(0, 2, 1, 3)
    scores = jnp.einsum("bhqd,bhkd->bhqk", q, k, precision=hp) / math.sqrt(D)
    scores = scores + bias
    probs = jax.nn.softmax(scores, axis=-1)
    ctx = jnp.einsum("bhqk,bhkd->bhqd", probs, v, precision=hp)
    ctx = ctx.transpose(0, 2, 1, 3).reshape(B, L, hidden)
    return jnp.dot(ctx, wo, precision=hp) + bo


if __name__ == "__main__":
    key = jax.random.PRNGKey(0)
    B, H, L, hidden = 2, 4, 8, 128            # head_dim = 32
    D = hidden // H
    k1, k2, k3, k4, k5 = jax.random.split(key, 5)

    x = jax.random.normal(k1, (B, L, hidden), jnp.float32) * 0.5
    wqkv = jax.random.normal(k2, (hidden, 3 * hidden), jnp.float32) / math.sqrt(hidden)
    bqkv = jax.random.normal(k3, (3 * hidden,), jnp.float32) * 0.02
    wo = jax.random.normal(k4, (hidden, hidden), jnp.float32) / math.sqrt(hidden)
    bo = jax.random.normal(k5, (hidden,), jnp.float32) * 0.02

    cos, sin = rope_cos_sin(L, D)

    # HF-style extended attention mask -> additive bias (B, 1, 1, L).
    mask = jnp.array([[1] * L, [1] * 6 + [0] * 2], jnp.float32)
    attention_bias = (1.0 - mask)[:, None, None, :] * -10000.0

    out = new_attention_forward(
        x, wqkv, bqkv, wo, bo, cos, sin, attention_bias, num_heads=H
    )
    jax.block_until_ready(out)

    ref = _reference_forward(x, wqkv, bqkv, wo, bo, cos, sin, attention_bias, H)
    assert out.shape == (B, L, hidden)
    max_err = float(jnp.max(jnp.abs(out - ref)))
    assert jnp.allclose(out, ref, atol=1e-2, rtol=1e-2), max_err

    print("KERNEL_OK")
</pallas_src>

<mosaic_0001>
module attributes {stable_mosaic.version = 11 : i64} {
  func.func @_matmul_bias_kernel(%arg0: i32, %arg1: i32, %arg2: i32, %arg3: memref<16x128xf32, #tpu.memory_space<vmem>>, %arg4: memref<128x384xf32, #tpu.memory_space<vmem>>, %arg5: memref<1x384xf32, #tpu.memory_space<vmem>>, %arg6: memref<16x384xf32, #tpu.memory_space<vmem>>, %arg7: memref<16x384xf32, #tpu.memory_space<vmem>>) attributes {dimension_semantics = [#tpu.dimension_semantics<parallel>, #tpu.dimension_semantics<parallel>, #tpu.dimension_semantics<arbitrary>], iteration_bounds = array<i64: 1, 1, 1>, scalar_prefetch = 0 : i64, scratch_operands = 1 : i64, tpu.core_type = #tpu.core_type<tc>, window_params = [{transform_indices = @transform_0, window_bounds = array<i64: 16, 128>}, {transform_indices = @transform_1, window_bounds = array<i64: 128, 384>}, {transform_indices = @transform_2, window_bounds = array<i64: 1, 384>}, {transform_indices = @transform_3, window_bounds = array<i64: 16, 384>}]} {
    %c0_i32 = arith.constant 0 : i32
    %0 = arith.cmpi eq, %arg2, %c0_i32 : i32
    %1 = arith.extui %0 : i1 to i32
    %c0_i32_0 = arith.constant 0 : i32
    %2 = arith.cmpi ne, %1, %c0_i32_0 : i32
    scf.if %2 {
      %cst_10 = arith.constant 0.000000e+00 : f32
      %12 = vector.broadcast %cst_10 : f32 to vector<16x384xf32>
      %c0_11 = arith.constant 0 : index
      %c0_12 = arith.constant 0 : index
      %13 = vector.load %arg7[%c0_11, %c0_12] : memref<16x384xf32, #tpu.memory_space<vmem>>, vector<16x384xf32>
      tpu.vector_store %arg7[%c0_11, %c0_12], %12 {strides = array<i32>} : memref<16x384xf32, #tpu.memory_space<vmem>>, vector<16x384xf32>,
    } else {
    }
    %c0 = arith.constant 0 : index
    %c0_1 = arith.constant 0 : index
    %3 = vector.load %arg7[%c0, %c0_1] : memref<16x384xf32, #tpu.memory_space<vmem>>, vector<16x384xf32>
    %c0_2 = arith.constant 0 : index
    %c0_3 = arith.constant 0 : index
    %4 = vector.load %arg3[%c0_2, %c0_3] : memref<16x128xf32, #tpu.memory_space<vmem>>, vector<16x128xf32>
    %c0_4 = arith.constant 0 : index
    %c0_5 = arith.constant 0 : index
    %5 = vector.load %arg4[%c0_4, %c0_5] : memref<128x384xf32, #tpu.memory_space<vmem>>, vector<128x384xf32>
    %cst = arith.constant dense<0.000000e+00> : vector<16x384xf32>
    %6 = tpu.matmul %4, %5, %cst {dimension_numbers = #tpu.dot_dimension_numbers<[1], [0], [0], [1], [0, 0, 1, 1], [], []>} : vector<16x128xf32>, vector<128x384xf32>, vector<16x384xf32> -> vector<16x384xf32>
    %7 = arith.addf %3, %6 : vector<16x384xf32>
    %c0_6 = arith.constant 0 : index
    %c0_7 = arith.constant 0 : index
    %8 = vector.load %arg7[%c0_6, %c0_7] : memref<16x384xf32, #tpu.memory_space<vmem>>, vector<16x384xf32>
    tpu.vector_store %arg7[%c0_6, %c0_7], %7 {strides = array<i32>} : memref<16x384xf32, #tpu.memory_space<vmem>>, vector<16x384xf32>,
    %c0_i32_8 = arith.constant 0 : i32
    %9 = arith.cmpi eq, %arg2, %c0_i32_8 : i32
    %10 = arith.extui %9 : i1 to i32
    %c0_i32_9 = arith.constant 0 : i32
    %11 = arith.cmpi ne, %10, %c0_i32_9 : i32
    scf.if %11 {
      %c0_10 = arith.constant 0 : index
      %c0_11 = arith.constant 0 : index
      %12 = vector.load %arg7[%c0_10, %c0_11] : memref<16x384xf32, #tpu.memory_space<vmem>>, vector<16x384xf32>
      %c0_12 = arith.constant 0 : index
      %c0_13 = arith.constant 0 : index
      %13 = vector.load %arg5[%c0_12, %c0_13] : memref<1x384xf32, #tpu.memory_space<vmem>>, vector<1x384xf32>
      %14 = vector.broadcast %13 : vector<1x384xf32> to vector<16x384xf32>
      %15 = arith.addf %12, %14 : vector<16x384xf32>
      %c0_14 = arith.constant 0 : index
      %c0_15 = arith.constant 0 : index
      %16 = vector.load %arg6[%c0_14, %c0_15] : memref<16x384xf32, #tpu.memory_space<vmem>>, vector<16x384xf32>
      tpu.vector_store %arg6[%c0_14, %c0_15], %15 {strides = array<i32>} : memref<16x384xf32, #tpu.memory_space<vmem>>, vector<16x384xf32>,
    } else {
    }
    return
  }
  func.func @transform_0(%arg0: i32, %arg1: i32, %arg2: i32) -> (i32, i32) {
    %c0_i32 = arith.constant 0 : i32
    return %arg0, %arg2 : i32, i32
  }
  func.func @transform_1(%arg0: i32, %arg1: i32, %arg2: i32) -> (i32, i32) {
    %c0_i32 = arith.constant 0 : i32
    return %arg2, %arg1 : i32, i32
  }
  func.func @transform_2(%arg0: i32, %arg1: i32, %arg2: i32) -> (i32, i32) {
    %c0_i32 = arith.constant 0 : i32
    %c0_i32_0 = arith.constant 0 : i32
    return %c0_i32, %arg1 : i32, i32
  }
  func.func @transform_3(%arg0: i32, %arg1: i32, %arg2: i32) -> (i32, i32) {
    %c0_i32 = arith.constant 0 : i32
    return %arg0, %arg1 : i32, i32
  }
}

module attributes {stable_mosaic.version = 11 : i64} {
  func.func @_matmul_bias_kernel(%arg0: i32, %arg1: i32, %arg2: i32, %arg3: memref<16x128xf32, #tpu.memory_space<vmem>>, %arg4: memref<128x128xf32, #tpu.memory_space<vmem>>, %arg5: memref<1x128xf32, #tpu.memory_space<vmem>>, %arg6: memref<16x128xf32, #tpu.memory_space<vmem>>, %arg7: memref<16x128xf32, #tpu.memory_space<vmem>>) attributes {dimension_semantics = [#tpu.dimension_semantics<parallel>, #tpu.dimension_semantics<parallel>, #tpu.dimension_semantics<arbitrary>], iteration_bounds = array<i64: 1, 1, 1>, scalar_prefetch = 0 : i64, scratch_operands = 1 : i64, tpu.core_type = #tpu.core_type<tc>, window_params = [{transform_indices = @transform_0, window_bounds = array<i64: 16, 128>}, {transform_indices = @transform_1, window_bounds = array<i64: 128, 128>}, {transform_indices = @transform_2, window_bounds = array<i64: 1, 128>}, {transform_indices = @transform_3, window_bounds = array<i64: 16, 128>}]} {
    %c0_i32 = arith.constant 0 : i32
    %0 = arith.cmpi eq, %arg2, %c0_i32 : i32
    %1 = arith.extui %0 : i1 to i32
    %c0_i32_0 = arith.constant 0 : i32
    %2 = arith.cmpi ne, %1, %c0_i32_0 : i32
    scf.if %2 {
      %cst_10 = arith.constant 0.000000e+00 : f32
      %12 = vector.broadcast %cst_10 : f32 to vector<16x128xf32>
      %c0_11 = arith.constant 0 : index
      %c0_12 = arith.constant 0 : index
      %13 = vector.load %arg7[%c0_11, %c0_12] : memref<16x128xf32, #tpu.memory_space<vmem>>, vector<16x128xf32>
      tpu.vector_store %arg7[%c0_11, %c0_12], %12 {strides = array<i32>} : memref<16x128xf32, #tpu.memory_space<vmem>>, vector<16x128xf32>,
    } else {
    }
    %c0 = arith.constant 0 : index
    %c0_1 = arith.constant 0 : index
    %3 = vector.load %arg7[%c0, %c0_1] : memref<16x128xf32, #tpu.memory_space<vmem>>, vector<16x128xf32>
    %c0_2 = arith.constant 0 : index
    %c0_3 = arith.constant 0 : index
    %4 = vector.load %arg3[%c0_2, %c0_3] : memref<16x128xf32, #tpu.memory_space<vmem>>, vector<16x128xf32>
    %c0_4 = arith.constant 0 : index
    %c0_5 = arith.constant 0 : index
    %5 = vector.load %arg4[%c0_4, %c0_5] : memref<128x128xf32, #tpu.memory_space<vmem>>, vector<128x128xf32>
    %cst = arith.constant dense<0.000000e+00> : vector<16x128xf32>
    %6 = tpu.matmul %4, %5, %cst {dimension_numbers = #tpu.dot_dimension_numbers<[1], [0], [0], [1], [0, 0, 1, 1], [], []>} : vector<16x128xf32>, vector<128x128xf32>, vector<16x128xf32> -> vector<16x128xf32>
    %7 = arith.addf %3, %6 : vector<16x128xf32>
    %c0_6 = arith.constant 0 : index
    %c0_7 = arith.constant 0 : index
    %8 = vector.load %arg7[%c0_6, %c0_7] : memref<16x128xf32, #tpu.memory_space<vmem>>, vector<16x128xf32>
    tpu.vector_store %arg7[%c0_6, %c0_7], %7 {strides = array<i32>} : memref<16x128xf32, #tpu.memory_space<vmem>>, vector<16x128xf32>,
    %c0_i32_8 = arith.constant 0 : i32
    %9 = arith.cmpi eq, %arg2, %c0_i32_8 : i32
    %10 = arith.extui %9 : i1 to i32
    %c0_i32_9 = arith.constant 0 : i32
    %11 = arith.cmpi ne, %10, %c0_i32_9 : i32
    scf.if %11 {
      %c0_10 = arith.constant 0 : index
      %c0_11 = arith.constant 0 : index
      %12 = vector.load %arg7[%c0_10, %c0_11] : memref<16x128xf32, #tpu.memory_space<vmem>>, vector<16x128xf32>
      %c0_12 = arith.constant 0 : index
      %c0_13 = arith.constant 0 : index
      %13 = vector.load %arg5[%c0_12, %c0_13] : memref<1x128xf32, #tpu.memory_space<vmem>>, vector<1x128xf32>
      %14 = vector.broadcast %13 : vector<1x128xf32> to vector<16x128xf32>
      %15 = arith.addf %12, %14 : vector<16x128xf32>
      %c0_14 = arith.constant 0 : index
      %c0_15 = arith.constant 0 : index
      %16 = vector.load %arg6[%c0_14, %c0_15] : memref<16x128xf32, #tpu.memory_space<vmem>>, vector<16x128xf32>
      tpu.vector_store %arg6[%c0_14, %c0_15], %15 {strides = array<i32>} : memref<16x128xf32, #tpu.memory_space<vmem>>, vector<16x128xf32>,
    } else {
    }
    return
  }
  func.func @transform_0(%arg0: i32, %arg1: i32, %arg2: i32) -> (i32, i32) {
    %c0_i32 = arith.constant 0 : i32
    return %arg0, %arg2 : i32, i32
  }
  func.func @transform_1(%arg0: i32, %arg1: i32, %arg2: i32) -> (i32, i32) {
    %c0_i32 = arith.constant 0 : i32
    return %arg2, %arg1 : i32, i32
  }
  func.func @transform_2(%arg0: i32, %arg1: i32, %arg2: i32) -> (i32, i32) {
    %c0_i32 = arith.constant 0 : i32
    %c0_i32_0 = arith.constant 0 : i32
    return %c0_i32, %arg1 : i32, i32
  }
  func.func @transform_3(%arg0: i32, %arg1: i32, %arg2: i32) -> (i32, i32) {
    %c0_i32 = arith.constant 0 : i32
    return %arg0, %arg1 : i32, i32
  }
}

module attributes {stable_mosaic.version = 11 : i64} {
  func.func @_rope_flash_attn_kernel(%arg0: i32, %arg1: i32, %arg2: i32, %arg3: memref<1x8x32xf32, #tpu.memory_space<vmem>>, %arg4: memref<1x8x32xf32, #tpu.memory_space<vmem>>, %arg5: memref<1x8x32xf32, #tpu.memory_space<vmem>>, %arg6: memref<8x32xf32, #tpu.memory_space<vmem>>, %arg7: memref<8x32xf32, #tpu.memory_space<vmem>>, %arg8: memref<8x32xf32, #tpu.memory_space<vmem>>, %arg9: memref<8x32xf32, #tpu.memory_space<vmem>>, %arg10: memref<1x8x8xf32, #tpu.memory_space<vmem>>, %arg11: memref<1x8x32xf32, #tpu.memory_space<vmem>>, %arg12: memref<1x8x1xf32, #tpu.memory_space<vmem>>, %arg13: memref<1x8x1xf32, #tpu.memory_space<vmem>>, %arg14: memref<1x8x32xf32, #tpu.memory_space<vmem>>) attributes {dimension_semantics = [#tpu.dimension_semantics<parallel>, #tpu.dimension_semantics<parallel>, #tpu.dimension_semantics<arbitrary>], iteration_bounds = array<i64: 8, 1, 1>, scalar_prefetch = 0 : i64, scratch_operands = 3 : i64, tpu.core_type = #tpu.core_type<tc>, window_params = [{transform_indices = @transform_0, window_bounds = array<i64: 1, 8, 32>}, {transform_indices = @transform_1, window_bounds = array<i64: 1, 8, 32>}, {transform_indices = @transform_2, window_bounds = array<i64: 1, 8, 32>}, {transform_indices = @transform_3, window_bounds = array<i64: 8, 32>}, {transform_indices = @transform_4, window_bounds = array<i64: 8, 32>}, {transform_indices = @transform_5, window_bounds = array<i64: 8, 32>}, {transform_indices = @transform_6, window_bounds = array<i64: 8, 32>}, {transform_indices = @transform_7, window_bounds = array<i64: 1, 8, 8>}, {transform_indices = @transform_8, window_bounds = array<i64: 1, 8, 32>}]} {
    %c0_i32 = arith.constant 0 : i32
    %0 = arith.cmpi eq, %arg2, %c0_i32 : i32
    %1 = arith.extui %0 : i1 to i32
    %c0_i32_0 = arith.constant 0 : i32
    %2 = arith.cmpi ne, %1, %c0_i32_0 : i32
    scf.if %2 {
      %cst_49 = arith.constant 0xFF800000 : f32
      %61 = vector.broadcast %cst_49 : f32 to vector<1x8x1xf32>
      %c0_50 = arith.constant 0 : index
      %c0_51 = arith.constant 0 : index
      %c0_52 = arith.constant 0 : index
      %62 = vector.load %arg12[%c0_50, %c0_51, %c0_52] : memref<1x8x1xf32, #tpu.memory_space<vmem>>, vector<1x8x1xf32>
      tpu.vector_store %arg12[%c0_50, %c0_51, %c0_52], %61 {strides = array<i32>} : memref<1x8x1xf32, #tpu.memory_space<vmem>>, vector<1x8x1xf32>,
      %cst_53 = arith.constant 0.000000e+00 : f32
      %63 = vector.broadcast %cst_53 : f32 to vector<1x8x1xf32>
      %c0_54 = arith.constant 0 : index
      %c0_55 = arith.constant 0 : index
      %c0_56 = arith.constant 0 : index
      %64 = vector.load %arg13[%c0_54, %c0_55, %c0_56] : memref<1x8x1xf32, #tpu.memory_space<vmem>>, vector<1x8x1xf32>
      tpu.vector_store %arg13[%c0_54, %c0_55, %c0_56], %63 {strides = array<i32>} : memref<1x8x1xf32, #tpu.memory_space<vmem>>, vector<1x8x1xf32>,
      %cst_57 = arith.constant 0.000000e+00 : f32
      %65 = vector.broadcast %cst_57 : f32 to vector<1x8x32xf32>
      %c0_58 = arith.constant 0 : index
      %c0_59 = arith.constant 0 : index
      %c0_60 = arith.constant 0 : index
      %66 = vector.load %arg14[%c0_58, %c0_59, %c0_60] : memref<1x8x32xf32, #tpu.memory_space<vmem>>, vector<1x8x32xf32>
      tpu.vector_store %arg14[%c0_58, %c0_59, %c0_60], %65 {strides = array<i32>} : memref<1x8x32xf32, #tpu.memory_space<vmem>>, vector<1x8x32xf32>,
    } else {
    }
    %c0 = arith.constant 0 : index
    %c0_1 = arith.constant 0 : index
    %c0_2 = arith.constant 0 : index
    %3 = vector.load %arg3[%c0, %c0_1, %c0_2] : memref<1x8x32xf32, #tpu.memory_space<vmem>>, vector<1x8x32xf32>
    %c0_3 = arith.constant 0 : index
    %c0_4 = arith.constant 0 : index
    %4 = vector.load %arg6[%c0_3, %c0_4] : memref<8x32xf32, #tpu.memory_space<vmem>>, vector<8x32xf32>
    %5 = vector.shape_cast %4 : vector<8x32xf32> to vector<1x8x32xf32>
    %c0_5 = arith.constant 0 : index
    %c0_6 = arith.constant 0 : index
    %6 = vector.load %arg7[%c0_5, %c0_6] : memref<8x32xf32, #tpu.memory_space<vmem>>, vector<8x32xf32>
    %7 = vector.shape_cast %6 : vector<8x32xf32> to vector<1x8x32xf32>
    %8 = vector.extract_strided_slice %3 {offsets = [0, 0, 0], sizes = [1, 8, 16], strides = [1, 1, 1]} : vector<1x8x32xf32> to vector<1x8x16xf32>
    %9 = vector.extract_strided_slice %3 {offsets = [0, 0, 16], sizes = [1, 8, 16], strides = [1, 1, 1]} : vector<1x8x32xf32> to vector<1x8x16xf32>
    %cst = arith.constant 0.000000e+00 : f32
    %10 = vector.broadcast %cst : f32 to vector<1x8x16xf32>
    %11 = arith.subf %10, %9 : vector<1x8x16xf32>
    %12 = tpu.concatenate %11, %8 in 2 : vector<1x8x16xf32>, vector<1x8x16xf32> -> vector<1x8x32xf32>
    %13 = arith.mulf %3, %5 : vector<1x8x32xf32>
    %14 = arith.mulf %12, %7 : vector<1x8x32xf32>
    %15 = arith.addf %13, %14 : vector<1x8x32xf32>
    %c0_7 = arith.constant 0 : index
    %c0_8 = arith.constant 0 : index
    %c0_9 = arith.constant 0 : index
    %16 = vector.load %arg4[%c0_7, %c0_8, %c0_9] : memref<1x8x32xf32, #tpu.memory_space<vmem>>, vector<1x8x32xf32>
    %c0_10 = arith.constant 0 : index
    %c0_11 = arith.constant 0 : index
    %17 = vector.load %arg8[%c0_10, %c0_11] : memref<8x32xf32, #tpu.memory_space<vmem>>, vector<8x32xf32>
    %18 = vector.shape_cast %17 : vector<8x32xf32> to vector<1x8x32xf32>
    %c0_12 = arith.constant 0 : index
    %c0_13 = arith.constant 0 : index
    %19 = vector.load %arg9[%c0_12, %c0_13] : memref<8x32xf32, #tpu.memory_space<vmem>>, vector<8x32xf32>
    %20 = vector.shape_cast %19 : vector<8x32xf32> to vector<1x8x32xf32>
    %21 = vector.extract_strided_slice %16 {offsets = [0, 0, 0], sizes = [1, 8, 16], strides = [1, 1, 1]} : vector<1x8x32xf32> to vector<1x8x16xf32>
    %22 = vector.extract_strided_slice %16 {offsets = [0, 0, 16], sizes = [1, 8, 16], strides = [1, 1, 1]} : vector<1x8x32xf32> to vector<1x8x16xf32>
    %cst_14 = arith.constant 0.000000e+00 : f32
    %23 = vector.broadcast %cst_14 : f32 to vector<1x8x16xf32>
    %24 = arith.subf %23, %22 : vector<1x8x16xf32>
    %25 = tpu.concatenate %24, %21 in 2 : vector<1x8x16xf32>, vector<1x8x16xf32> -> vector<1x8x32xf32>
    %26 = arith.mulf %16, %18 : vector<1x8x32xf32>
    %27 = arith.mulf %25, %20 : vector<1x8x32xf32>
    %28 = arith.addf %26, %27 : vector<1x8x32xf32>
    %c0_15 = arith.constant 0 : index
    %c0_16 = arith.constant 0 : index
    %c0_17 = arith.constant 0 : index
    %29 = vector.load %arg5[%c0_15, %c0_16, %c0_17] : memref<1x8x32xf32, #tpu.memory_space<vmem>>, vector<1x8x32xf32>
    "tpu.trace_start"() <{level = 10 : i32, message = "bqd,bkd->bqk"}> : () -> ()
    %cst_18 = arith.constant dense<0.000000e+00> : vector<1x8x8xf32>
    %30 = tpu.matmul %15, %28, %cst_18 {dimension_numbers = #tpu.dot_dimension_numbers<[2], [2], [1], [1], [0, 0, 0, 1, 1, 1], [0], [0]>} : vector<1x8x32xf32>, vector<1x8x32xf32>, vector<1x8x8xf32> -> vector<1x8x8xf32>
    "tpu.trace_stop"() : () -> ()
    %cst_19 = arith.constant 0.176776692 : f32
    %31 = vector.broadcast %cst_19 : f32 to vector<1x8x8xf32>
    %32 = arith.mulf %30, %31 : vector<1x8x8xf32>
    %c0_20 = arith.constant 0 : index
    %c0_21 = arith.constant 0 : index
    %c0_22 = arith.constant 0 : index
    %33 = vector.load %arg10[%c0_20, %c0_21, %c0_22] : memref<1x8x8xf32, #tpu.memory_space<vmem>>, vector<1x8x8xf32>
    %34 = arith.addf %32, %33 : vector<1x8x8xf32>
    %c0_23 = arith.constant 0 : index
    %c0_24 = arith.constant 0 : index
    %c0_25 = arith.constant 0 : index
    %35 = vector.load %arg12[%c0_23, %c0_24, %c0_25] : memref<1x8x1xf32, #tpu.memory_space<vmem>>, vector<1x8x1xf32>
    %cst_26 = arith.constant dense<0xFF800000> : vector<1x8xf32>
    %36 = vector.multi_reduction <maximumf>, %34, %cst_26 [2] : vector<1x8x8xf32> to vector<1x8xf32>
    %37 = vector.shape_cast %36 : vector<1x8xf32> to vector<1x8x1xf32>
    %38 = arith.maximumf %35, %37 : vector<1x8x1xf32>
    %c0_27 = arith.constant 0 : index
    %c0_28 = arith.constant 0 : index
    %c0_29 = arith.constant 0 : index
    %39 = vector.load %arg12[%c0_27, %c0_28, %c0_29] : memref<1x8x1xf32, #tpu.memory_space<vmem>>, vector<1x8x1xf32>
    %40 = arith.subf %39, %38 : vector<1x8x1xf32>
    %41 = math.exp %40 : vector<1x8x1xf32>
    %42 = vector.broadcast %38 : vector<1x8x1xf32> to vector<1x8x8xf32>
    %43 = arith.subf %34, %42 : vector<1x8x8xf32>
    %44 = math.exp %43 : vector<1x8x8xf32>
    %c0_30 = arith.constant 0 : index
    %c0_31 = arith.constant 0 : index
    %c0_32 = arith.constant 0 : index
    %45 = vector.load %arg13[%c0_30, %c0_31, %c0_32] : memref<1x8x1xf32, #tpu.memory_space<vmem>>, vector<1x8x1xf32>
    %46 = arith.mulf %41, %45 : vector<1x8x1xf32>
    %cst_33 = arith.constant dense<0.000000e+00> : vector<1x8xf32>
    %47 = vector.multi_reduction <add>, %44, %cst_33 [2] : vector<1x8x8xf32> to vector<1x8xf32>
    %48 = vector.shape_cast %47 : vector<1x8xf32> to vector<1x8x1xf32>
    %49 = arith.addf %46, %48 : vector<1x8x1xf32>
    %c0_34 = arith.constant 0 : index
    %c0_35 = arith.constant 0 : index
    %c0_36 = arith.constant 0 : index
    %50 = vector.load %arg13[%c0_34, %c0_35, %c0_36] : memref<1x8x1xf32, #tpu.memory_space<vmem>>, vector<1x8x1xf32>
    tpu.vector_store %arg13[%c0_34, %c0_35, %c0_36], %49 {strides = array<i32>} : memref<1x8x1xf32, #tpu.memory_space<vmem>>, vector<1x8x1xf32>,
    %c0_37 = arith.constant 0 : index
    %c0_38 = arith.constant 0 : index
    %c0_39 = arith.constant 0 : index
    %51 = vector.load %arg14[%c0_37, %c0_38, %c0_39] : memref<1x8x32xf32, #tpu.memory_space<vmem>>, vector<1x8x32xf32>
    %52 = vector.broadcast %41 : vector<1x8x1xf32> to vector<1x8x32xf32>
    %53 = arith.mulf %52, %51 : vector<1x8x32xf32>
    "tpu.trace_start"() <{level = 10 : i32, message = "bqk,bkd->bqd"}> : () -> ()
    %cst_40 = arith.constant dense<0.000000e+00> : vector<1x8x32xf32>
    %54 = tpu.matmul %44, %29, %cst_40 {dimension_numbers = #tpu.dot_dimension_numbers<[2], [1], [1], [2], [0, 0, 0, 1, 1, 2], [0], [0]>} : vector<1x8x8xf32>, vector<1x8x32xf32>, vector<1x8x32xf32> -> vector<1x8x32xf32>
    "tpu.trace_stop"() : () -> ()
    %55 = arith.addf %53, %54 : vector<1x8x32xf32>
    %c0_41 = arith.constant 0 : index
    %c0_42 = arith.constant 0 : index
    %c0_43 = arith.constant 0 : index
    %56 = vector.load %arg14[%c0_41, %c0_42, %c0_43] : memref<1x8x32xf32, #tpu.memory_space<vmem>>, vector<1x8x32xf32>
    tpu.vector_store %arg14[%c0_41, %c0_42, %c0_43], %55 {strides = array<i32>} : memref<1x8x32xf32, #tpu.memory_space<vmem>>, vector<1x8x32xf32>,
    %c0_44 = arith.constant 0 : index
    %c0_45 = arith.constant 0 : index
    %c0_46 = arith.constant 0 : index
    %57 = vector.load %arg12[%c0_44, %c0_45, %c0_46] : memref<1x8x1xf32, #tpu.memory_space<vmem>>, vector<1x8x1xf32>
    tpu.vector_store %arg12[%c0_44, %c0_45, %c0_46], %38 {strides = array<i32>} : memref<1x8x1xf32, #tpu.memory_space<vmem>>, vector<1x8x1xf32>,
    %c0_i32_47 = arith.constant 0 : i32
    %58 = arith.cmpi eq, %arg2, %c0_i32_47 : i32
    %59 = arith.extui %58 : i1 to i32
    %c0_i32_48 = arith.constant 0 : i32
    %60 = arith.cmpi ne, %59, %c0_i32_48 : i32
    scf.if %60 {
      %c0_49 = arith.constant 0 : index
      %c0_50 = arith.constant 0 : index
      %c0_51 = arith.constant 0 : index
      %61 = vector.load %arg14[%c0_49, %c0_50, %c0_51] : memref<1x8x32xf32, #tpu.memory_space<vmem>>, vector<1x8x32xf32>
      %c0_52 = arith.constant 0 : index
      %c0_53 = arith.constant 0 : index
      %c0_54 = arith.constant 0 : index
      %62 = vector.load %arg13[%c0_52, %c0_53, %c0_54] : memref<1x8x1xf32, #tpu.memory_space<vmem>>, vector<1x8x1xf32>
      %63 = vector.broadcast %62 : vector<1x8x1xf32> to vector<1x8x32xf32>
      %64 = arith.divf %61, %63 : vector<1x8x32xf32>
      %c0_55 = arith.constant 0 : index
      %c0_56 = arith.constant 0 : index
      %c0_57 = arith.constant 0 : index
      %65 = vector.load %arg11[%c0_55, %c0_56, %c0_57] : memref<1x8x32xf32, #tpu.memory_space<vmem>>, vector<1x8x32xf32>
      tpu.vector_store %arg11[%c0_55, %c0_56, %c0_57], %64 {strides = array<i32>} : memref<1x8x32xf32, #tpu.memory_space<vmem>>, vector<1x8x32xf32>,
    } else {
    }
    return
  }
  func.func @transform_0(%arg0: i32, %arg1: i32, %arg2: i32) -> (i32, i32, i32) {
    %c0_i32 = arith.constant 0 : i32
    %c0_i32_0 = arith.constant 0 : i32
    return %arg0, %arg1, %c0_i32 : i32, i32, i32
  }
  func.func @transform_1(%arg0: i32, %arg1: i32, %arg2: i32) -> (i32, i32, i32) {
    %c0_i32 = arith.constant 0 : i32
    %c0_i32_0 = arith.constant 0 : i32
    return %arg0, %arg2, %c0_i32 : i32, i32, i32
  }
  func.func @transform_2(%arg0: i32, %arg1: i32, %arg2: i32) -> (i32, i32, i32) {
    %c0_i32 = arith.constant 0 : i32
    %c0_i32_0 = arith.constant 0 : i32
    return %arg0, %arg2, %c0_i32 : i32, i32, i32
  }
  func.func @transform_3(%arg0: i32, %arg1: i32, %arg2: i32) -> (i32, i32) {
    %c0_i32 = arith.constant 0 : i32
    %c0_i32_0 = arith.constant 0 : i32
    return %arg1, %c0_i32 : i32, i32
  }
  func.func @transform_4(%arg0: i32, %arg1: i32, %arg2: i32) -> (i32, i32) {
    %c0_i32 = arith.constant 0 : i32
    %c0_i32_0 = arith.constant 0 : i32
    return %arg1, %c0_i32 : i32, i32
  }
  func.func @transform_5(%arg0: i32, %arg1: i32, %arg2: i32) -> (i32, i32) {
    %c0_i32 = arith.constant 0 : i32
    %c0_i32_0 = arith.constant 0 : i32
    return %arg2, %c0_i32 : i32, i32
  }
  func.func @transform_6(%arg0: i32, %arg1: i32, %arg2: i32) -> (i32, i32) {
    %c0_i32 = arith.constant 0 : i32
    %c0_i32_0 = arith.constant 0 : i32
    return %arg2, %c0_i32 : i32, i32
  }
  func.func @transform_7(%arg0: i32, %arg1: i32, %arg2: i32) -> (i32, i32, i32) {
    %c0_i32 = arith.constant 0 : i32
    return %arg0, %arg1, %arg2 : i32, i32, i32
  }
  func.func @transform_8(%arg0: i32, %arg1: i32, %arg2: i32) -> (i32, i32, i32) {
    %c0_i32 = arith.constant 0 : i32
    %c0_i32_0 = arith.constant 0 : i32
    return %arg0, %arg1, %c0_i32 : i32, i32, i32
  }
}

</mosaic_0001>

<llo_original>
// kernel: new_attention_forward.3
$region0: #{new_attention_forward.3}
  #allocation0 [shape = 'u32[]', space=smem, size = 0x4, offset = 0x4, fixed_abs, tag = 'smem constant byte address 0x4 - core index']
  #allocation1 [shape = 'u32[144,128]{1,0:T(1,128)}', space=vmem, size = 0x12000, scoped, tag = 'internal scratch']
  #allocation2 [shape = 'f32[16,384]{1,0:T(8,128)}', space=vmem, size = 0x6000, scoped, tag = 'scratch operand']
  %s0 = inlined_call_operand.vmem [shape: f32[16,128], index: 0, kind: input, shape index: {}]
  %s1 = inlined_call_operand.hbm [shape: f32[128,384], index: 1, kind: input, shape index: {}]
  %s2 = inlined_call_operand.vmem [shape: f32[1,384], index: 2, kind: input, shape index: {}]
  %s3 = inlined_call_operand.vmem [shape: f32[16,384], index: 3, kind: output, shape index: {}]
  %s4 = sld [smem:[#allocation0]]
  $region34: #{new_attention_forward.3} parent=0
    _
  %s6 = ssub.s32 1, %s4
  %s7 = scalar_select 0, %s6, %s4
  $region1: #{new_attention_forward.3} parent=0
    #allocation3 [shape = 'u8[196608]{0}', space=vmem, size = 0x30000, scoped, tag = 'input window, operand 1, single buffered']
    #allocation4 [shape = 's32[1]{0}', space=sflag, size = 0x4, scoped, tag = 'scoped memory for new_attention_forward.3']
    %8 = vsyncpa [#allocation4], 0
    // Predicated region
    $region2: #{new_attention_forward.3} parent=1 // pred_check
      _
    $region3: #{new_attention_forward.3} parent=1 // pred_check_branch
      %10 = sbr.rel (0) target = $region5
    $region4: #{new_attention_forward.3} parent=1 // pred_region
      _
    $region5: #{new_attention_forward.3} parent=1 // pred_fallthru
      _
    // Predicated region
    $region6: #{new_attention_forward.3} parent=1 // pred_check
      _
    $region7: #{new_attention_forward.3} parent=1 // pred_check_branch
      %12 = sbr.rel (0) target = $region9
    $region8: #{new_attention_forward.3} parent=1 // pred_region
      %s14 = ssub.s32 6144, 6144
      %15 = vsyncadd [#allocation4], %s14
      %s16 = sshll.u32 [#allocation3], 4
      %s17 = int_to_ptr.vmem [resolvable:$true] %s16
      %22 = dma.hbm_to_vmem [thread:$0]  %s1, 6144, %s17, [#allocation4], 384, 384, 24
    $region9: #{new_attention_forward.3} parent=1 // pred_fallthru
      _
    // Predicated region
    $region10: #{new_attention_forward.3} parent=1 // pred_check
      _
    $region11: #{new_attention_forward.3} parent=1 // pred_check_branch
      %24 = sbr.rel (0) target = $region13
    $region12: #{new_attention_forward.3} parent=1 // pred_region
      _
    $region13: #{new_attention_forward.3} parent=1 // pred_fallthru
      _
    // Predicated region
    $region14: #{new_attention_forward.3} parent=1 // pred_check
      _
    $region15: #{new_attention_forward.3} parent=1 // pred_check_branch
      %26 = sbr.rel (0) target = $region17
    $region16: #{new_attention_forward.3} parent=1 // pred_region
      %27 = dma.done [#allocation4], 6144
    $region17: #{new_attention_forward.3} parent=1 // pred_fallthru
      _
    %p28 = scmp.eq.s32.totalorder 0, 0
    // Predicated region
    $region18: #{new_attention_forward.3} parent=1 // pred_check
      %p29 = pneg %p28
    $region19: #{new_attention_forward.3} parent=1 // pred_check_branch
      %31 = sbr.rel (%p29) target = $region21
    $region20: #{new_attention_forward.3} parent=1 // pred_region
      %32 = vst [vmem:[#allocation2] sm:$0xff] 0.0
      %33 = vst [vmem:[#allocation2 + $0x8] sm:$0xff] 0.0
      %34 = vst [vmem:[#allocation2 + $0x10] sm:$0xff] 0.0
      %35 = vst [vmem:[#allocation2 + $0x18] sm:$0xff] 0.0
      %36 = vst [vmem:[#allocation2 + $0x20] sm:$0xff] 0.0
      %37 = vst [vmem:[#allocation2 + $0x28] sm:$0xff] 0.0
    $region21: #{new_attention_forward.3} parent=1 // pred_fallthru
      _
    %v38 = vld [vmem:[#allocation2] sm:$0xff]
    %v39 = vld [vmem:[#allocation2 + $0x8] sm:$0xff]
    %v40 = vld [vmem:[#allocation2 + $0x10] sm:$0xff]
    %v41 = vld [vmem:[#allocation2 + $0x18] sm:$0xff]
    %v42 = vld [vmem:[#allocation2 + $0x20] sm:$0xff]
    %v43 = vld [vmem:[#allocation2 + $0x28] sm:$0xff]
    %v44 = vld [vmem:[%s0] sm:$0xff]
    %v45 = vld [vmem:[%s0 + $0x8] sm:$0xff]
    %v46 = vld [vmem:[#allocation3] sm:$0xff]
    %v47 = vld [vmem:[#allocation3 + $0x8] sm:$0xff]
    %v48 = vld [vmem:[#allocation3 + $0x10] sm:$0xff]
    %v49 = vld [vmem:[#allocation3 + $0x18] sm:$0xff]
    %v50 = vld [vmem:[#allocation3 + $0x20] sm:$0xff]
    %v51 = vld [vmem:[#allocation3 + $0x28] sm:$0xff]
    %v52 = vld [vmem:[#allocation3 + $0x30] sm:$0xff]
    %v53 = vld [vmem:[#allocation3 + $0x38] sm:$0xff]
    %v54 = vld [vmem:[#allocation3 + $0x40] sm:$0xff]
    %v55 = vld [vmem:[#allocation3 + $0x48] sm:$0xff]
    %v56 = vld [vmem:[#allocation3 + $0x50] sm:$0xff]
    %v57 = vld [vmem:[#allocation3 + $0x58] sm:$0xff]
    %v58 = vld [vmem:[#allocation3 + $0x60] sm:$0xff]
    %v59 = vld [vmem:[#allocation3 + $0x68] sm:$0xff]
    %v60 = vld [vmem:[#allocation3 + $0x70] sm:$0xff]
    %v61 = vld [vmem:[#allocation3 + $0x78] sm:$0xff]
    %v62 = vld [vmem:[#allocation3 + $0x80] sm:$0xff]
    %v63 = vld [vmem:[#allocation3 + $0x88] sm:$0xff]
    %v64 = vld [vmem:[#allocation3 + $0x90] sm:$0xff]
    %v65 = vld [vmem:[#allocation3 + $0x98] sm:$0xff]
    %v66 = vld [vmem:[#allocation3 + $0xa0] sm:$0xff]
    %v67 = vld [vmem:[#allocation3 + $0xa8] sm:$0xff]
    %v68 = vld [vmem:[#allocation3 + $0xb0] sm:$0xff]
    %v69 = vld [vmem:[#allocation3 + $0xb8] sm:$0xff]
    %v70 = vld [vmem:[#allocation3 + $0xc0] sm:$0xff]
    %v71 = vld [vmem:[#allocation3 + $0xc8] sm:$0xff]
    %v72 = vld [vmem:[#allocation3 + $0xd0] sm:$0xff]
    %v73 = vld [vmem:[#allocation3 + $0xd8] sm:$0xff]
    %v74 = vld [vmem:[#allocation3 + $0xe0] sm:$0xff]
    %v75 = vld [vmem:[#allocation3 + $0xe8] sm:$0xff]
    %v76 = vld [vmem:[#allocation3 + $0xf0] sm:$0xff]
    %v77 = vld [vmem:[#allocation3 + $0xf8] sm:$0xff]
    %v78 = vld [vmem:[#allocation3 + $0x100] sm:$0xff]
    %v79 = vld [vmem:[#allocation3 + $0x108] sm:$0xff]
    %v80 = vld [vmem:[#allocation3 + $0x110] sm:$0xff]
    %v81 = vld [vmem:[#allocation3 + $0x118] sm:$0xff]
    %v82 = vld [vmem:[#allocation3 + $0x120] sm:$0xff]
    %v83 = vld [vmem:[#allocation3 + $0x128] sm:$0xff]
    %v84 = vld [vmem:[#allocation3 + $0x130] sm:$0xff]
    %v85 = vld [vmem:[#allocation3 + $0x138] sm:$0xff]
    %v86 = vld [vmem:[#allocation3 + $0x140] sm:$0xff]
    %v87 = vld [vmem:[#allocation3 + $0x148] sm:$0xff]
    %v88 = vld [vmem:[#allocation3 + $0x150] sm:$0xff]
    %v89 = vld [vmem:[#allocation3 + $0x158] sm:$0xff]
    %v90 = vld [vmem:[#allocation3 + $0x160] sm:$0xff]
    %v91 = vld [vmem:[#allocation3 + $0x168] sm:$0xff]
    %v92 = vld [vmem:[#allocation3 + $0x170] sm:$0xff]
    %v93 = vld [vmem:[#allocation3 + $0x178] sm:$0xff]
    %94 = vmatprep.subr.mxu0 %v47
    %95 = vmatpush1.msra.mxu0 %v46
    %96 = vmatprep.subr.mxu0 %v50
    %97 = vmatpush1.msra.mxu0 %v49
    %98 = vmatprep.subr.mxu0 %v53
    %99 = vmatpush1.msra.mxu0 %v52
    %100 = vmatprep.subr.mxu0 %v56
    %101 = vmatpush1.msra.mxu0 %v55
    %102 = vmatprep.subr.mxu0 %v59
    %103 = vmatpush1.msra.mxu0 %v58
    %104 = vmatprep.subr.mxu0 %v62
    %105 = vmatpush1.msra.mxu0 %v61
    %106 = vmatprep.subr.mxu0 %v65
    %107 = vmatpush1.msra.mxu0 %v64
    %108 = vmatprep.subr.mxu0 %v68
    %109 = vmatpush1.msra.mxu0 %v67
    %110 = vmatprep.subr.mxu0 %v71
    %111 = vmatpush1.msra.mxu0 %v70
    %112 = vmatprep.subr.mxu0 %v74
    %113 = vmatpush1.msra.mxu0 %v73
    %114 = vmatprep.subr.mxu0 %v77
    %115 = vmatpush1.msra.mxu0 %v76
    %116 = vmatprep.subr.mxu0 %v80
    %117 = vmatpush1.msra.mxu0 %v79
    %118 = vmatprep.subr.mxu0 %v83
    %119 = vmatpush1.msra.mxu0 %v82
    %120 = vmatprep.subr.mxu0 %v86
    %121 = vmatpush1.msra.mxu0 %v85
    %122 = vmatprep.subr.mxu0 %v89
    %123 = vmatpush1.msra.mxu0 %v88
    %124 = vmatprep.subr.mxu0 %v92
    %125 = vmatpush1.msra.mxu0 %v91
    %126 = vmatprep.subr.mxu0 0.0
    %127 = vmatpush1.msra.mxu0 0.0
    %128 = vmatprep.subr.mxu0 0.0
    %129 = vmatpush1.msra.mxu0 0.0
    %130 = vmatprep.subr.mxu0 0.0
    %131 = vmatpush1.msra.mxu0 0.0
    %132 = vmatprep.subr.mxu0 0.0
    %133 = vmatpush1.msra.mxu0 0.0
    %134 = vmatprep.subr.mxu0 0.0
    %135 = vmatpush1.msra.mxu0 0.0
    %136 = vmatprep.subr.mxu0 0.0
    %137 = vmatpush1.msra.mxu0 0.0
    %138 = vmatprep.subr.mxu0 0.0
    %139 = vmatpush1.msra.mxu0 0.0
    %140 = vmatprep.subr.mxu0 0.0
    %141 = vmatpush1.msra.mxu0 0.0
    %142 = vmatprep.subr.mxu0 0.0
    %143 = vmatpush1.msra.mxu0 0.0
    %144 = vmatprep.subr.mxu0 0.0
    %145 = vmatpush1.msra.mxu0 0.0
    %146 = vmatprep.subr.mxu0 0.0
    %147 = vmatpush1.msra.mxu0 0.0
    %148 = vmatprep.subr.mxu0 0.0
    %149 = vmatpush1.msra.mxu0 0.0
    %150 = vmatprep.subr.mxu0 0.0
    %151 = vmatpush1.msra.mxu0 0.0
    %152 = vmatprep.subr.mxu0 0.0
    %153 = vmatpush1.msra.mxu0 0.0
    %154 = vmatprep.subr.mxu0 0.0
    %155 = vmatpush1.msra.mxu0 0.0
    %156 = vmatprep.subr.mxu0 0.0
    %157 = vmatpush1.msra.mxu0 0.0
    %158 = vmatprep.mubr.f32.mxu0 0.0
    %159 = vmatmul.mubr.f32.gmra.mrb[0].mxu0 %v44
    %v160 = vpop.f32.mrb[0].mxu0
    %v161 = vadd.f32 0.0, %v160
    %v162 = vpop.f32.mrb[0].mxu0
    %v163 = vadd.f32 0.0, %v162
    %164 = vmatprep.mubr.f32.mxu0 0.0
    %165 = vmatmul.mubr.f32.gmra.mrb[0].mxu0 %v45
    %v166 = vpop.f32.mrb[0].mxu0
    %v167 = vadd.f32 0.0, %v166
    %v168 = vpop.f32.mrb[0].mxu0
    %v169 = vadd.f32 0.0, %v168
    %170 = vdwg.mxu0
    %171 = vmatprep.subr.mxu0 0.0
    %172 = vmatpush1.msra.mxu0 %v48
    %173 = vmatprep.subr.mxu0 0.0
    %174 = vmatpush1.msra.mxu0 %v51
    %175 = vmatprep.subr.mxu0 0.0
    %176 = vmatpush1.msra.mxu0 %v54
    %177 = vmatprep.subr.mxu0 0.0
    %178 = vmatpush1.msra.mxu0 %v57
    %179 = vmatprep.subr.mxu0 0.0
    %180 = vmatpush1.msra.mxu0 %v60
    %181 = vmatprep.subr.mxu0 0.0
    %182 = vmatpush1.msra.mxu0 %v63
    %183 = vmatprep.subr.mxu0 0.0
    %184 = vmatpush1.msra.mxu0 %v66
    %185 = vmatprep.subr.mxu0 0.0
    %186 = vmatpush1.msra.mxu0 %v69
    %187 = vmatprep.subr.mxu0 0.0
    %188 = vmatpush1.msra.mxu0 %v72
    %189 = vmatprep.subr.mxu0 0.0
    %190 = vmatpush1.msra.mxu0 %v75
    %191 = vmatprep.subr.mxu0 0.0
    %192 = vmatpush1.msra.mxu0 %v78
    %193 = vmatprep.subr.mxu0 0.0
    %194 = vmatpush1.msra.mxu0 %v81
    %195 = vmatprep.subr.mxu0 0.0
    %196 = vmatpush1.msra.mxu0 %v84
    %197 = vmatprep.subr.mxu0 0.0
    %198 = vmatpush1.msra.mxu0 %v87
    %199 = vmatprep.subr.mxu0 0.0
    %200 = vmatpush1.msra.mxu0 %v90
    %201 = vmatprep.subr.mxu0 0.0
    %202 = vmatpush1.msra.mxu0 %v93
    %203 = vmatprep.subr.mxu0 0.0
    %204 = vmatpush1.msra.mxu0 0.0
    %205 = vmatprep.subr.mxu0 0.0
    %206 = vmatpush1.msra.mxu0 0.0
    %207 = vmatprep.subr.mxu0 0.0
    %208 = vmatpush1.msra.mxu0 0.0
    %209 = vmatprep.subr.mxu0 0.0
    %210 = vmatpush1.msra.mxu0 0.0
    %211 = vmatprep.subr.mxu0 0.0
    %212 = vmatpush1.msra.mxu0 0.0
    %213 = vmatprep.subr.mxu0 0.0
    %214 = vmatpush1.msra.mxu0 0.0
    %215 = vmatprep.subr.mxu0 0.0
    %216 = vmatpush1.msra.mxu0 0.0
    %217 = vmatprep.subr.mxu0 0.0
    %218 = vmatpush1.msra.mxu0 0.0
    %219 = vmatprep.subr.mxu0 0.0
    %220 = vmatpush1.msra.mxu0 0.0
    %221 = vmatprep.subr.mxu0 0.0
    %222 = vmatpush1.msra.mxu0 0.0
    %223 = vmatprep.subr.mxu0 0.0
    %224 = vmatpush1.msra.mxu0 0.0
    %225 = vmatprep.subr.mxu0 0.0
    %226 = vmatpush1.msra.mxu0 0.0
    %227 = vmatprep.subr.mxu0 0.0
    %228 = vmatpush1.msra.mxu0 0.0
    %229 = vmatprep.subr.mxu0 0.0
    %230 = vmatpush1.msra.mxu0 0.0
    %231 = vmatprep.subr.mxu0 0.0
    %232 = vmatpush1.msra.mxu0 0.0
    %233 = vmatprep.subr.mxu0 0.0
    %234 = vmatpush1.msra.mxu0 0.0
    %235 = vmatprep.mubr.f32.mxu0 0.0
    %236 = vmatmul.mubr.f32.gmra.mrb[0].mxu0 %v44
    %v237 = vpop.f32.mrb[0].mxu0
    %v238 = vadd.f32 0.0, %v237
    %v239 = vpop.f32.mrb[0].mxu0
    %240 = vmatprep.mubr.f32.mxu0 0.0
    %241 = vmatmul.mubr.f32.gmra.mrb[0].mxu0 %v45
    %v242 = vpop.f32.mrb[0].mxu0
    %v243 = vadd.f32 0.0, %v242
    %v244 = vpop.f32.mrb[0].mxu0
    %245 = vdwg.mxu0
    %v246 = vadd.f32 %v38, %v161
    %v247 = vadd.f32 %v39, %v163
    %v248 = vadd.f32 %v40, %v238
    %v249 = vadd.f32 %v41, %v167
    %v250 = vadd.f32 %v42, %v169
    %v251 = vadd.f32 %v43, %v243
    %252 = vst [vmem:[#allocation2] sm:$0xff] %v246
    %253 = vst [vmem:[#allocation2 + $0x8] sm:$0xff] %v247
    %254 = vst [vmem:[#allocation2 + $0x10] sm:$0xff] %v248
    %255 = vst [vmem:[#allocation2 + $0x18] sm:$0xff] %v249
    %256 = vst [vmem:[#allocation2 + $0x20] sm:$0xff] %v250
    %257 = vst [vmem:[#allocation2 + $0x28] sm:$0xff] %v251
    // Predicated region
    $region22: #{new_attention_forward.3} parent=1 // pred_check
      %p258 = pneg %p28
    $region23: #{new_attention_forward.3} parent=1 // pred_check_branch
      %260 = sbr.rel (%p258) target = $region25
    $region24: #{new_attention_forward.3} parent=1 // pred_region
      %v261 = vld [vmem:[#allocation2] sm:$0xff]
      %v262 = vld [vmem:[#allocation2 + $0x8] sm:$0xff]
      %v263 = vld [vmem:[#allocation2 + $0x10] sm:$0xff]
      %v264 = vld [vmem:[#allocation2 + $0x18] sm:$0xff]
      %v265 = vld [vmem:[#allocation2 + $0x20] sm:$0xff]
      %v266 = vld [vmem:[#allocation2 + $0x28] sm:$0xff]
      %v267 = vld [vmem:[%s2] sm:$0x7]
      %v269 = vlaneseq
      %v270 = vshrl.u32 %v269, 7
      %v271 = vsub.s32 0, %v270
      %v272 = vrot.slane %v267, %v271
      %v273 = vlaneseq
      %v274 = vshrl.u32 %v273, 7
      %v275 = vsub.s32 1, %v274
      %v276 = vrot.slane %v267, %v275
      %v277 = vlaneseq
      %v278 = vshrl.u32 %v277, 7
      %v279 = vsub.s32 2, %v278
      %v280 = vrot.slane %v267, %v279
      %v284 = vadd.f32 %v261, %v272
      %v285 = vadd.f32 %v262, %v276
      %v286 = vadd.f32 %v263, %v280
      %v287 = vadd.f32 %v264, %v272
      %v288 = vadd.f32 %v265, %v276
      %v289 = vadd.f32 %v266, %v280
      %290 = vst [vmem:[%s3] sm:$0xff] %v284
      %291 = vst [vmem:[%s3 + $0x8] sm:$0xff] %v285
      %292 = vst [vmem:[%s3 + $0x10] sm:$0xff] %v286
      %293 = vst [vmem:[%s3 + $0x18] sm:$0xff] %v287
      %294 = vst [vmem:[%s3 + $0x20] sm:$0xff] %v288
      %295 = vst [vmem:[%s3 + $0x28] sm:$0xff] %v289
    $region25: #{new_attention_forward.3} parent=1 // pred_fallthru
      _
    // Predicated region
    $region26: #{new_attention_forward.3} parent=1 // pred_check
      _
    $region27: #{new_attention_forward.3} parent=1 // pred_check_branch
      %297 = sbr.rel (0) target = $region29
    $region28: #{new_attention_forward.3} parent=1 // pred_region
      _
    $region29: #{new_attention_forward.3} parent=1 // pred_fallthru
      _
    // Predicated region
    $region30: #{new_attention_forward.3} parent=1 // pred_check
      _
    $region31: #{new_attention_forward.3} parent=1 // pred_check_branch
      %299 = sbr.rel (0) target = $region33
    $region32: #{new_attention_forward.3} parent=1 // pred_region
      _
    $region33: #{new_attention_forward.3} parent=1 // pred_fallthru
      _
    %300 = vsyncpa [#allocation4], 1

// kernel: new_attention_forward.5
$region0: #{new_attention_forward.5}
  #allocation0 [shape = 'u32[]', space=smem, size = 0x4, offset = 0x4, fixed_abs, tag = 'smem constant byte address 0x4 - core index']
  #allocation1 [shape = 'u32[144,128]{1,0:T(1,128)}', space=vmem, size = 0x12000, scoped, tag = 'internal scratch']
  #allocation2 [shape = 'f32[16,128]{1,0:T(8,128)}', space=vmem, size = 0x2000, scoped, tag = 'scratch operand']
  %s0 = inlined_call_operand.vmem [shape: f32[16,128], index: 0, kind: input, shape index: {}]
  %s1 = inlined_call_operand.vmem [shape: f32[128,128], index: 1, kind: input, shape index: {}]
  %s2 = inlined_call_operand.vmem [shape: f32[1,128], index: 2, kind: input, shape index: {}]
  %s3 = inlined_call_operand.hbm [shape: f32[16,128], index: 3, kind: output, shape index: {}]
  %s4 = sld [smem:[#allocation0]]
  $region30: #{new_attention_forward.5} parent=0
    _
  %s6 = ssub.s32 1, %s4
  %s7 = scalar_select 0, %s6, %s4
  $region1: #{new_attention_forward.5} parent=0
    #allocation3 [shape = 'u8[8192]{0}', space=vmem, size = 0x2000, scoped, tag = 'output window, operand 0, single buffered']
    #allocation4 [shape = 's32[1]{0}', space=sflag, size = 0x4, scoped, tag = 'scoped memory for new_attention_forward.5']
    %8 = vsyncpa [#allocation4], 0
    // Predicated region
    $region2: #{new_attention_forward.5} parent=1 // pred_check
      _
    $region3: #{new_attention_forward.5} parent=1 // pred_check_branch
      %10 = sbr.rel (0) target = $region5
    $region4: #{new_attention_forward.5} parent=1 // pred_region
      _
    $region5: #{new_attention_forward.5} parent=1 // pred_fallthru
      _
    // Predicated region
    $region6: #{new_attention_forward.5} parent=1 // pred_check
      _
    $region7: #{new_attention_forward.5} parent=1 // pred_check_branch
      %12 = sbr.rel (0) target = $region9
    $region8: #{new_attention_forward.5} parent=1 // pred_region
      _
    $region9: #{new_attention_forward.5} parent=1 // pred_fallthru
      _
    // Predicated region
    $region10: #{new_attention_forward.5} parent=1 // pred_check
      _
    $region11: #{new_attention_forward.5} parent=1 // pred_check_branch
      %14 = sbr.rel (0) target = $region13
    $region12: #{new_attention_forward.5} parent=1 // pred_region
      _
    $region13: #{new_attention_forward.5} parent=1 // pred_fallthru
      _
    %p15 = scmp.eq.s32.totalorder 0, 0
    // Predicated region
    $region14: #{new_attention_forward.5} parent=1 // pred_check
      %p16 = pneg %p15
    $region15: #{new_attention_forward.5} parent=1 // pred_check_branch
      %18 = sbr.rel (%p16) target = $region17
    $region16: #{new_attention_forward.5} parent=1 // pred_region
      %19 = vst [vmem:[#allocation2] sm:$0xff] 0.0
      %20 = vst [vmem:[#allocation2 + $0x8] sm:$0xff] 0.0
    $region17: #{new_attention_forward.5} parent=1 // pred_fallthru
      _
    %v21 = vld [vmem:[#allocation2] sm:$0xff]
    %v22 = vld [vmem:[#allocation2 + $0x8] sm:$0xff]
    %v23 = vld [vmem:[%s0] sm:$0xff]
    %v24 = vld [vmem:[%s0 + $0x8] sm:$0xff]
    %v25 = vld [vmem:[%s1] sm:$0xff]
    %v26 = vld [vmem:[%s1 + $0x8] sm:$0xff]
    %v27 = vld [vmem:[%s1 + $0x10] sm:$0xff]
    %v28 = vld [vmem:[%s1 + $0x18] sm:$0xff]
    %v29 = vld [vmem:[%s1 + $0x20] sm:$0xff]
    %v30 = vld [vmem:[%s1 + $0x28] sm:$0xff]
    %v31 = vld [vmem:[%s1 + $0x30] sm:$0xff]
    %v32 = vld [vmem:[%s1 + $0x38] sm:$0xff]
    %v33 = vld [vmem:[%s1 + $0x40] sm:$0xff]
    %v34 = vld [vmem:[%s1 + $0x48] sm:$0xff]
    %v35 = vld [vmem:[%s1 + $0x50] sm:$0xff]
    %v36 = vld [vmem:[%s1 + $0x58] sm:$0xff]
    %v37 = vld [vmem:[%s1 + $0x60] sm:$0xff]
    %v38 = vld [vmem:[%s1 + $0x68] sm:$0xff]
    %v39 = vld [vmem:[%s1 + $0x70] sm:$0xff]
    %v40 = vld [vmem:[%s1 + $0x78] sm:$0xff]
    %41 = vmatprep.subr.mxu0 0.0
    %42 = vmatpush1.msra.mxu0 %v25
    %43 = vmatprep.subr.mxu0 0.0
    %44 = vmatpush1.msra.mxu0 %v26
    %45 = vmatprep.subr.mxu0 0.0
    %46 = vmatpush1.msra.mxu0 %v27
    %47 = vmatprep.subr.mxu0 0.0
    %48 = vmatpush1.msra.mxu0 %v28
    %49 = vmatprep.subr.mxu0 0.0
    %50 = vmatpush1.msra.mxu0 %v29
    %51 = vmatprep.subr.mxu0 0.0
    %52 = vmatpush1.msra.mxu0 %v30
    %53 = vmatprep.subr.mxu0 0.0
    %54 = vmatpush1.msra.mxu0 %v31
    %55 = vmatprep.subr.mxu0 0.0
    %56 = vmatpush1.msra.mxu0 %v32
    %57 = vmatprep.subr.mxu0 0.0
    %58 = vmatpush1.msra.mxu0 %v33
    %59 = vmatprep.subr.mxu0 0.0
    %60 = vmatpush1.msra.mxu0 %v34
    %61 = vmatprep.subr.mxu0 0.0
    %62 = vmatpush1.msra.mxu0 %v35
    %63 = vmatprep.subr.mxu0 0.0
    %64 = vmatpush1.msra.mxu0 %v36
    %65 = vmatprep.subr.mxu0 0.0
    %66 = vmatpush1.msra.mxu0 %v37
    %67 = vmatprep.subr.mxu0 0.0
    %68 = vmatpush1.msra.mxu0 %v38
    %69 = vmatprep.subr.mxu0 0.0
    %70 = vmatpush1.msra.mxu0 %v39
    %71 = vmatprep.subr.mxu0 0.0
    %72 = vmatpush1.msra.mxu0 %v40
    %73 = vmatprep.subr.mxu0 0.0
    %74 = vmatpush1.msra.mxu0 0.0
    %75 = vmatprep.subr.mxu0 0.0
    %76 = vmatpush1.msra.mxu0 0.0
    %77 = vmatprep.subr.mxu0 0.0
    %78 = vmatpush1.msra.mxu0 0.0
    %79 = vmatprep.subr.mxu0 0.0
    %80 = vmatpush1.msra.mxu0 0.0
    %81 = vmatprep.subr.mxu0 0.0
    %82 = vmatpush1.msra.mxu0 0.0
    %83 = vmatprep.subr.mxu0 0.0
    %84 = vmatpush1.msra.mxu0 0.0
    %85 = vmatprep.subr.mxu0 0.0
    %86 = vmatpush1.msra.mxu0 0.0
    %87 = vmatprep.subr.mxu0 0.0
    %88 = vmatpush1.msra.mxu0 0.0
    %89 = vmatprep.subr.mxu0 0.0
    %90 = vmatpush1.msra.mxu0 0.0
    %91 = vmatprep.subr.mxu0 0.0
    %92 = vmatpush1.msra.mxu0 0.0
    %93 = vmatprep.subr.mxu0 0.0
    %94 = vmatpush1.msra.mxu0 0.0
    %95 = vmatprep.subr.mxu0 0.0
    %96 = vmatpush1.msra.mxu0 0.0
    %97 = vmatprep.subr.mxu0 0.0
    %98 = vmatpush1.msra.mxu0 0.0
    %99 = vmatprep.subr.mxu0 0.0
    %100 = vmatpush1.msra.mxu0 0.0
    %101 = vmatprep.subr.mxu0 0.0
    %102 = vmatpush1.msra.mxu0 0.0
    %103 = vmatprep.subr.mxu0 0.0
    %104 = vmatpush1.msra.mxu0 0.0
    %105 = vmatprep.mubr.f32.mxu0 0.0
    %106 = vmatmul.mubr.f32.gmra.mrb[0].mxu0 %v23
    %v107 = vpop.f32.mrb[0].mxu0
    %v108 = vadd.f32 0.0, %v107
    %v109 = vpop.f32.mrb[0].mxu0
    %110 = vmatprep.mubr.f32.mxu0 0.0
    %111 = vmatmul.mubr.f32.gmra.mrb[0].mxu0 %v24
    %v112 = vpop.f32.mrb[0].mxu0
    %v113 = vadd.f32 0.0, %v112
    %v114 = vpop.f32.mrb[0].mxu0
    %115 = vdwg.mxu0
    %v116 = vadd.f32 %v21, %v108
    %v117 = vadd.f32 %v22, %v113
    %118 = vst [vmem:[#allocation2] sm:$0xff] %v116
    %119 = vst [vmem:[#allocation2 + $0x8] sm:$0xff] %v117
    // Predicated region
    $region18: #{new_attention_forward.5} parent=1 // pred_check
      %p120 = pneg %p15
    $region19: #{new_attention_forward.5} parent=1 // pred_check_branch
      %122 = sbr.rel (%p120) target = $region21
    $region20: #{new_attention_forward.5} parent=1 // pred_region
      %v123 = vld [vmem:[#allocation2] sm:$0xff]
      %v124 = vld [vmem:[#allocation2 + $0x8] sm:$0xff]
      %v125 = vld [vmem:[%s2] sm:$0x1]
      %v127 = vlaneseq
      %v128 = vshrl.u32 %v127, 7
      %v129 = vsub.s32 0, %v128
      %v130 = vrot.slane %v125, %v129
      %v132 = vadd.f32 %v123, %v130
      %v133 = vadd.f32 %v124, %v130
      %134 = vst [vmem:[#allocation3] sm:$0xff] %v132
      %135 = vst [vmem:[#allocation3 + $0x8] sm:$0xff] %v133
    $region21: #{new_attention_forward.5} parent=1 // pred_fallthru
      _
    // Predicated region
    $region22: #{new_attention_forward.5} parent=1 // pred_check
      _
    $region23: #{new_attention_forward.5} parent=1 // pred_check_branch
      %137 = sbr.rel (0) target = $region25
    $region24: #{new_attention_forward.5} parent=1 // pred_region
      %s139 = ssub.s32 256, 256
      %140 = vsyncadd [#allocation4], %s139
      %s141 = sshll.u32 [#allocation3], 4
      %s142 = int_to_ptr.vmem [resolvable:$true] %s141
      %147 = dma.vmem_to_hbm [thread:$0]  %s142, 256, %s3, [#allocation4], 128, 128, 8
    $region25: #{new_attention_forward.5} parent=1 // pred_fallthru
      _
    // Predicated region
    $region26: #{new_attention_forward.5} parent=1 // pred_check
      _
    $region27: #{new_attention_forward.5} parent=1 // pred_check_branch
      %149 = sbr.rel (0) target = $region29
    $region28: #{new_attention_forward.5} parent=1 // pred_region
      %150 = dma.done [#allocation4], 256
    $region29: #{new_attention_forward.5} parent=1 // pred_fallthru
      _
    %151 = vsyncpa [#allocation4], 1

// kernel: new_attention_forward.4
$region0: #{new_attention_forward.4}
  #allocation0 [shape = 'u32[]', space=smem, size = 0x4, offset = 0x4, fixed_abs, tag = 'smem constant byte address 0x4 - core index']
  #allocation1 [shape = 'u32[144,128]{1,0:T(1,128)}', space=vmem, size = 0x12000, scoped, tag = 'internal scratch']
  #allocation2 [shape = 'f32[1,8,1]{2,1,0:T(8,128)}', space=vmem, size = 0x1000, scoped, tag = 'scratch operand']
  #allocation3 [shape = 'f32[1,8,1]{2,1,0:T(8,128)}', space=vmem, size = 0x1000, scoped, tag = 'scratch operand']
  #allocation4 [shape = 'f32[1,8,32]{2,1,0:T(8,128)}', space=vmem, size = 0x1000, scoped, tag = 'scratch operand']
  %s0 = inlined_call_operand.vmem [shape: f32[8,8,32], index: 0, kind: input, shape index: {}]
  %s1 = inlined_call_operand.vmem [shape: f32[8,8,32], index: 1, kind: input, shape index: {}]
  %s2 = inlined_call_operand.vmem [shape: f32[8,8,32], index: 2, kind: input, shape index: {}]
  %s3 = inlined_call_operand.vmem [shape: f32[8,32], index: 3, kind: input, shape index: {}, may-alias: {3,5}]
  %s4 = inlined_call_operand.vmem [shape: f32[8,32], index: 4, kind: input, shape index: {}, may-alias: {4,6}]
  %s5 = inlined_call_operand.vmem [shape: f32[8,32], index: 5, kind: input, shape index: {}, may-alias: {3,5}]
  %s6 = inlined_call_operand.vmem [shape: f32[8,32], index: 6, kind: input, shape index: {}, may-alias: {4,6}]
  %s7 = inlined_call_operand.vmem [shape: f32[8,8,8], index: 7, kind: input, shape index: {}]
  %s8 = inlined_call_operand.vmem [shape: f32[8,8,32], index: 8, kind: output, shape index: {}]
  %s9 = sld [smem:[#allocation0]]
  $region73: #{new_attention_forward.4} parent=0
    _
  %s11 = ssub.s32 1, %s9
  %s12 = scalar_select 0, %s11, %s9
  loop: start=0, step=1, limit=10
  $region2: #{new_attention_forward.4} parent=0 // loop_pre_header
    _
  $region3: #{new_attention_forward.4} parent=0 // loop_header
    %s14 = sphi 0, %s18
    %p15 = scmp.ge.s32.totalorder %s14, 10
    %s21 = sphi 0, %s40
    %s22 = sphi 0, %s36
    %s23 = sphi 0, %s32
    %s24 = sphi 0, %s21
    %s25 = sphi 0, %s22
    %s26 = sphi 0, %s23
    %s27 = sphi 0, %s24
    %s28 = sphi 0, %s25
    %s29 = sphi 0, %s26
    %s45 = sphi 0, %s47
    %s48 = sphi 0, %s45
    %s49 = sphi 0, %s48
    %s65 = sphi 0, %s49
    %s73 = sphi 0, %s75
    %s76 = sphi 0, %s73
    %s77 = sphi 0, %s76
    %s93 = sphi 0, %s77
    %s101 = sphi 0, %s103
    %s104 = sphi 0, %s101
    %s105 = sphi 0, %s104
    %s121 = sphi 0, %s105
    %s127 = sphi 0, %s129
    %s130 = sphi 0, %s127
    %s131 = sphi 0, %s130
    %s147 = sphi 0, %s131
    %s153 = sphi 0, %s155
    %s156 = sphi 0, %s153
    %s157 = sphi 0, %s156
    %s173 = sphi 0, %s157
    %s179 = sphi 0, %s181
    %s182 = sphi 0, %s179
    %s183 = sphi 0, %s182
    %s199 = sphi 0, %s183
    %s205 = sphi 0, %s207
    %s208 = sphi 0, %s205
    %s209 = sphi 0, %s208
    %s225 = sphi 0, %s209
    %s235 = sphi 0, %s237
    %s238 = sphi 0, %s235
    %s239 = sphi 0, %s238
    %s255 = sphi 0, %s239
    %s263 = sphi 0, %s265
    %s266 = sphi 0, %s263
    %s267 = sphi 0, %s266
    %s283 = sphi 0, %s267
  $region4: #{new_attention_forward.4} parent=0 // loop_header_branch
    %17 = sbr.rel (%p15) target = $region8
  $region5: #{new_attention_forward.4} parent=0 // loop_body
    %s19 = ssub.s32 %s14, 1
    %s20 = ssub.s32 %s14, 2
    %s30 = sadd.s32 1, %s23
    %p31 = scmp.ge.s32.totalorder %s30, 1
    %s32 = scalar_select %p31, 0, %s30
    %s33 = sadd.s32 1, %s22
    %s34 = scalar_select %p31, %s33, %s22
    %p35 = scmp.ge.s32.totalorder %s34, 1
    %s36 = scalar_select %p35, 0, %s34
    %s37 = sadd.s32 1, %s21
    %s38 = scalar_select %p35, %s37, %s21
    %p39 = scmp.ge.s32.totalorder %s38, 8
    %s40 = scalar_select %p39, 0, %s38
    %s41 = ssub.s32 %s21, %s40
    %s42 = ssub.s32 %s22, %s36
    %s43 = sor.u32 %s41, %s42
    %p44 = scmp.eq.s32.totalorder %s43, 0
    %s46 = sadd.s32 %s45, 1
    %s47 = scalar_select %p44, %s45, %s46
    %p50 = pneg %p44
    %p51 = scmp.eq.s32.totalorder %s14, 7
    %p52 = por %p50, %p51
    %p53 = scmp.ne.s32.totalorder %s45, %s48
    %p54 = scmp.eq.s32.totalorder %s14, 0
    %p55 = por %p53, %p54
    %p56 = scmp.ne.s32.totalorder %s45, %s48
    %p57 = scmp.eq.s32.totalorder %s19, 7
    %p58 = por %p56, %p57
    %p59 = scmp.ne.s32.totalorder %s48, %s49
    %p60 = scmp.eq.s32.totalorder %s19, 0
    %p61 = por %p59, %p60
    %p62 = scmp.ne.s32.totalorder %s48, %s49
    %p63 = scmp.eq.s32.totalorder %s20, 7
    %p64 = por %p62, %p63
    %p66 = scmp.ne.s32.totalorder %s49, %s65
    %p67 = scmp.eq.s32.totalorder %s20, 0
    %p68 = por %p66, %p67
    %s69 = ssub.s32 %s21, %s40
    %s70 = ssub.s32 %s23, %s32
    %s71 = sor.u32 %s69, %s70
    %p72 = scmp.eq.s32.totalorder %s71, 0
    %s74 = sadd.s32 %s73, 1
    %s75 = scalar_select %p72, %s73, %s74
    %p78 = pneg %p72
    %p79 = scmp.eq.s32.totalorder %s14, 7
    %p80 = por %p78, %p79
    %p81 = scmp.ne.s32.totalorder %s73, %s76
    %p82 = scmp.eq.s32.totalorder %s14, 0
    %p83 = por %p81, %p82
    %p84 = scmp.ne.s32.totalorder %s73, %s76
    %p85 = scmp.eq.s32.totalorder %s19, 7
    %p86 = por %p84, %p85
    %p87 = scmp.ne.s32.totalorder %s76, %s77
    %p88 = scmp.eq.s32.totalorder %s19, 0
    %p89 = por %p87, %p88
    %p90 = scmp.ne.s32.totalorder %s76, %s77
    %p91 = scmp.eq.s32.totalorder %s20, 7
    %p92 = por %p90, %p91
    %p94 = scmp.ne.s32.totalorder %s77, %s93
    %p95 = scmp.eq.s32.totalorder %s20, 0
    %p96 = por %p94, %p95
    %s97 = ssub.s32 %s21, %s40
    %s98 = ssub.s32 %s23, %s32
    %s99 = sor.u32 %s97, %s98
    %p100 = scmp.eq.s32.totalorder %s99, 0
    %s102 = sadd.s32 %s101, 1
    %s103 = scalar_select %p100, %s101, %s102
    %p106 = pneg %p100
    %p107 = scmp.eq.s32.totalorder %s14, 7
    %p108 = por %p106, %p107
    %p109 = scmp.ne.s32.totalorder %s101, %s104
    %p110 = scmp.eq.s32.totalorder %s14, 0
    %p111 = por %p109, %p110
    %p112 = scmp.ne.s32.totalorder %s101, %s104
    %p113 = scmp.eq.s32.totalorder %s19, 7
    %p114 = por %p112, %p113
    %p115 = scmp.ne.s32.totalorder %s104, %s105
    %p116 = scmp.eq.s32.totalorder %s19, 0
    %p117 = por %p115, %p116
    %p118 = scmp.ne.s32.totalorder %s104, %s105
    %p119 = scmp.eq.s32.totalorder %s20, 7
    %p120 = por %p118, %p119
    %p122 = scmp.ne.s32.totalorder %s105, %s121
    %p123 = scmp.eq.s32.totalorder %s20, 0
    %p124 = por %p122, %p123
    %s125 = ssub.s32 %s22, %s36
    %p126 = scmp.eq.s32.totalorder %s125, 0
    %s128 = sadd.s32 %s127, 1
    %s129 = scalar_select %p126, %s127, %s128
    %p132 = pneg %p126
    %p133 = scmp.eq.s32.totalorder %s14, 7
    %p134 = por %p132, %p133
    %p135 = scmp.ne.s32.totalorder %s127, %s130
    %p136 = scmp.eq.s32.totalorder %s14, 0
    %p137 = por %p135, %p136
    %p138 = scmp.ne.s32.totalorder %s127, %s130
    %p139 = scmp.eq.s32.totalorder %s19, 7
    %p140 = por %p138, %p139
    %p141 = scmp.ne.s32.totalorder %s130, %s131
    %p142 = scmp.eq.s32.totalorder %s19, 0
    %p143 = por %p141, %p142
    %p144 = scmp.ne.s32.totalorder %s130, %s131
    %p145 = scmp.eq.s32.totalorder %s20, 7
    %p146 = por %p144, %p145
    %p148 = scmp.ne.s32.totalorder %s131, %s147
    %p149 = scmp.eq.s32.totalorder %s20, 0
    %p150 = por %p148, %p149
    %s151 = ssub.s32 %s22, %s36
    %p152 = scmp.eq.s32.totalorder %s151, 0
    %s154 = sadd.s32 %s153, 1
    %s155 = scalar_select %p152, %s153, %s154
    %p158 = pneg %p152
    %p159 = scmp.eq.s32.totalorder %s14, 7
    %p160 = por %p158, %p159
    %p161 = scmp.ne.s32.totalorder %s153, %s156
    %p162 = scmp.eq.s32.totalorder %s14, 0
    %p163 = por %p161, %p162
    %p164 = scmp.ne.s32.totalorder %s153, %s156
    %p165 = scmp.eq.s32.totalorder %s19, 7
    %p166 = por %p164, %p165
    %p167 = scmp.ne.s32.totalorder %s156, %s157
    %p168 = scmp.eq.s32.totalorder %s19, 0
    %p169 = por %p167, %p168
    %p170 = scmp.ne.s32.totalorder %s156, %s157
    %p171 = scmp.eq.s32.totalorder %s20, 7
    %p172 = por %p170, %p171
    %p174 = scmp.ne.s32.totalorder %s157, %s173
    %p175 = scmp.eq.s32.totalorder %s20, 0
    %p176 = por %p174, %p175
    %s177 = ssub.s32 %s23, %s32
    %p178 = scmp.eq.s32.totalorder %s177, 0
    %s180 = sadd.s32 %s179, 1
    %s181 = scalar_select %p178, %s179, %s180
    %p184 = pneg %p178
    %p185 = scmp.eq.s32.totalorder %s14, 7
    %p186 = por %p184, %p185
    %p187 = scmp.ne.s32.totalorder %s179, %s182
    %p188 = scmp.eq.s32.totalorder %s14, 0
    %p189 = por %p187, %p188
    %p190 = scmp.ne.s32.totalorder %s179, %s182
    %p191 = scmp.eq.s32.totalorder %s19, 7
    %p192 = por %p190, %p191
    %p193 = scmp.ne.s32.totalorder %s182, %s183
    %p194 = scmp.eq.s32.totalorder %s19, 0
    %p195 = por %p193, %p194
    %p196 = scmp.ne.s32.totalorder %s182, %s183
    %p197 = scmp.eq.s32.totalorder %s20, 7
    %p198 = por %p196, %p197
    %p200 = scmp.ne.s32.totalorder %s183, %s199
    %p201 = scmp.eq.s32.totalorder %s20, 0
    %p202 = por %p200, %p201
    %s203 = ssub.s32 %s23, %s32
    %p204 = scmp.eq.s32.totalorder %s203, 0
    %s206 = sadd.s32 %s205, 1
    %s207 = scalar_select %p204, %s205, %s206
    %p210 = pneg %p204
    %p211 = scmp.eq.s32.totalorder %s14, 7
    %p212 = por %p210, %p211
    %p213 = scmp.ne.s32.totalorder %s205, %s208
    %p214 = scmp.eq.s32.totalorder %s14, 0
    %p215 = por %p213, %p214
    %p216 = scmp.ne.s32.totalorder %s205, %s208
    %p217 = scmp.eq.s32.totalorder %s19, 7
    %p218 = por %p216, %p217
    %p219 = scmp.ne.s32.totalorder %s208, %s209
    %p220 = scmp.eq.s32.totalorder %s19, 0
    %p221 = por %p219, %p220
    %p222 = scmp.ne.s32.totalorder %s208, %s209
    %p223 = scmp.eq.s32.totalorder %s20, 7
    %p224 = por %p222, %p223
    %p226 = scmp.ne.s32.totalorder %s209, %s225
    %p227 = scmp.eq.s32.totalorder %s20, 0
    %p228 = por %p226, %p227
    %s229 = ssub.s32 %s21, %s40
    %s230 = ssub.s32 %s22, %s36
    %s231 = sor.u32 %s229, %s230
    %s232 = ssub.s32 %s23, %s32
    %s233 = sor.u32 %s231, %s232
    %p234 = scmp.eq.s32.totalorder %s233, 0
    %s236 = sadd.s32 %s235, 1
    %s237 = scalar_select %p234, %s235, %s236
    %p240 = pneg %p234
    %p241 = scmp.eq.s32.totalorder %s14, 7
    %p242 = por %p240, %p241
    %p243 = scmp.ne.s32.totalorder %s235, %s238
    %p244 = scmp.eq.s32.totalorder %s14, 0
    %p245 = por %p243, %p244
    %p246 = scmp.ne.s32.totalorder %s235, %s238
    %p247 = scmp.eq.s32.totalorder %s19, 7
    %p248 = por %p246, %p247
    %p249 = scmp.ne.s32.totalorder %s238, %s239
    %p250 = scmp.eq.s32.totalorder %s19, 0
    %p251 = por %p249, %p250
    %p252 = scmp.ne.s32.totalorder %s238, %s239
    %p253 = scmp.eq.s32.totalorder %s20, 7
    %p254 = por %p252, %p253
    %p256 = scmp.ne.s32.totalorder %s239, %s255
    %p257 = scmp.eq.s32.totalorder %s20, 0
    %p258 = por %p256, %p257
    %s259 = ssub.s32 %s21, %s40
    %s260 = ssub.s32 %s22, %s36
    %s261 = sor.u32 %s259, %s260
    %p262 = scmp.eq.s32.totalorder %s261, 0
    %s264 = sadd.s32 %s263, 1
    %s265 = scalar_select %p262, %s263, %s264
    %p268 = pneg %p262
    %p269 = scmp.eq.s32.totalorder %s14, 7
    %p270 = por %p268, %p269
    %p271 = scmp.ne.s32.totalorder %s263, %s266
    %p272 = scmp.eq.s32.totalorder %s14, 0
    %p273 = por %p271, %p272
    %p274 = scmp.ne.s32.totalorder %s263, %s266
    %p275 = scmp.eq.s32.totalorder %s19, 7
    %p276 = por %p274, %p275
    %p277 = scmp.ne.s32.totalorder %s266, %s267
    %p278 = scmp.eq.s32.totalorder %s19, 0
    %p279 = por %p277, %p278
    %p280 = scmp.ne.s32.totalorder %s266, %s267
    %p281 = scmp.eq.s32.totalorder %s20, 7
    %p282 = por %p280, %p281
    %p284 = scmp.ne.s32.totalorder %s267, %s283
    %p285 = scmp.eq.s32.totalorder %s20, 0
    %p286 = por %p284, %p285
    %p287 = scmp.le.s32.totalorder 1, %s14
    %p288 = scmp.lt.s32.totalorder %s14, 9
    %p289 = pnand %p287, %p288
    %p290 = pneg %p289
    // Predicated region
    $region9: #{new_attention_forward.4} parent=5 // pred_check
      _
    $region10: #{new_attention_forward.4} parent=5 // pred_check_branch
      %292 = sbr.rel (%p289) target = $region12
    $region11: #{new_attention_forward.4} parent=5 // pred_region
      %s293 = ssub.s32 %s14, 1
      // Predicated region
      $region13: #{new_attention_forward.4} parent=11 // pred_check
        %p294 = pneg %p143
      $region14: #{new_attention_forward.4} parent=11 // pred_check_branch
        %296 = sbr.rel (%p294) target = $region16
      $region15: #{new_attention_forward.4} parent=11 // pred_region
        %p297 = scmp.lt.s32.totalorder %s25, 0
        %s298 = scalar_select %p297, %s25, 0
        %s299 = smul.addr %s298, 8
        %s300 = scalar_lea.vmem %s3, %s299
      $region16: #{new_attention_forward.4} parent=11 // pred_fallthru
        _
      // Predicated region
      $region17: #{new_attention_forward.4} parent=11 // pred_check
        %p301 = pneg %p169
      $region18: #{new_attention_forward.4} parent=11 // pred_check_branch
        %303 = sbr.rel (%p301) target = $region20
      $region19: #{new_attention_forward.4} parent=11 // pred_region
        %p304 = scmp.lt.s32.totalorder %s25, 0
        %s305 = scalar_select %p304, %s25, 0
        %s306 = smul.addr %s305, 8
        %s307 = scalar_lea.vmem %s4, %s306
      $region20: #{new_attention_forward.4} parent=11 // pred_fallthru
        _
      // Predicated region
      $region21: #{new_attention_forward.4} parent=11 // pred_check
        %p308 = pneg %p195
      $region22: #{new_attention_forward.4} parent=11 // pred_check_branch
        %310 = sbr.rel (%p308) target = $region24
      $region23: #{new_attention_forward.4} parent=11 // pred_region
        %p311 = scmp.lt.s32.totalorder %s26, 0
        %s312 = scalar_select %p311, %s26, 0
        %s313 = smul.addr %s312, 8
        %s314 = scalar_lea.vmem %s5, %s313
      $region24: #{new_attention_forward.4} parent=11 // pred_fallthru
        _
      // Predicated region
      $region25: #{new_attention_forward.4} parent=11 // pred_check
        %p315 = pneg %p221
      $region26: #{new_attention_forward.4} parent=11 // pred_check_branch
        %317 = sbr.rel (%p315) target = $region28
      $region27: #{new_attention_forward.4} parent=11 // pred_region
        %p318 = scmp.lt.s32.totalorder %s26, 0
        %s319 = scalar_select %p318, %s26, 0
        %s320 = smul.addr %s319, 8
        %s321 = scalar_lea.vmem %s6, %s320
      $region28: #{new_attention_forward.4} parent=11 // pred_fallthru
        _
    $region12: #{new_attention_forward.4} parent=5 // pred_fallthru
      _
    %p322 = scmp.lt.s32.totalorder %s14, 8
    // Predicated region
    $region29: #{new_attention_forward.4} parent=5 // pred_check
      %p323 = pneg %p322
    $region30: #{new_attention_forward.4} parent=5 // pred_check_branch
      %325 = sbr.rel (%p323) target = $region32
    $region31: #{new_attention_forward.4} parent=5 // pred_region
      // Predicated region
      $region33: #{new_attention_forward.4} parent=31 // pred_check
        %p326 = pneg %p55
      $region34: #{new_attention_forward.4} parent=31 // pred_check_branch
        %328 = sbr.rel (%p326) target = $region36
      $region35: #{new_attention_forward.4} parent=31 // pred_region
        %p329 = scmp.lt.s32.totalorder %s21, 7
        %s330 = scalar_select %p329, %s21, 7
        %p331 = scmp.lt.s32.totalorder %s22, 0
        %s332 = scalar_select %p331, %s22, 0
        %s333 = sadd.s32 %s332, %s330
        %s334 = smul.addr %s333, 8
        %s335 = scalar_lea.vmem %s0, %s334
      $region36: #{new_attention_forward.4} parent=31 // pred_fallthru
        _
      // Predicated region
      $region37: #{new_attention_forward.4} parent=31 // pred_check
        %p336 = pneg %p83
      $region38: #{new_attention_forward.4} parent=31 // pred_check_branch
        %338 = sbr.rel (%p336) target = $region40
      $region39: #{new_attention_forward.4} parent=31 // pred_region
        %p339 = scmp.lt.s32.totalorder %s21, 7
        %s340 = scalar_select %p339, %s21, 7
        %p341 = scmp.lt.s32.totalorder %s23, 0
        %s342 = scalar_select %p341, %s23, 0
        %s343 = sadd.s32 %s342, %s340
        %s344 = smul.addr %s343, 8
        %s345 = scalar_lea.vmem %s1, %s344
      $region40: #{new_attention_forward.4} parent=31 // pred_fallthru
        _
      // Predicated region
      $region41: #{new_attention_forward.4} parent=31 // pred_check
        %p346 = pneg %p111
      $region42: #{new_attention_forward.4} parent=31 // pred_check_branch
        %348 = sbr.rel (%p346) target = $region44
      $region43: #{new_attention_forward.4} parent=31 // pred_region
        %p349 = scmp.lt.s32.totalorder %s21, 7
        %s350 = scalar_select %p349, %s21, 7
        %p351 = scmp.lt.s32.totalorder %s23, 0
        %s352 = scalar_select %p351, %s23, 0
        %s353 = sadd.s32 %s352, %s350
        %s354 = smul.addr %s353, 8
        %s355 = scalar_lea.vmem %s2, %s354
      $region44: #{new_attention_forward.4} parent=31 // pred_fallthru
        _
      // Predicated region
      $region45: #{new_attention_forward.4} parent=31 // pred_check
        %p356 = pneg %p245
      $region46: #{new_attention_forward.4} parent=31 // pred_check_branch
        %358 = sbr.rel (%p356) target = $region48
      $region47: #{new_attention_forward.4} parent=31 // pred_region
        %p359 = scmp.lt.s32.totalorder %s21, 7
        %s360 = scalar_select %p359, %s21, 7
        %p361 = scmp.lt.s32.totalorder %s22, 0
        %s362 = scalar_select %p361, %s22, 0
        %p363 = scmp.lt.s32.totalorder %s23, 0
        %s364 = scalar_select %p363, %s23, 0
        %s365 = sadd.s32 %s364, %s362
        %s366 = sadd.s32 %s365, %s360
        %s367 = smul.addr %s366, 8
        %s368 = scalar_lea.vmem %s7, %s367
      $region48: #{new_attention_forward.4} parent=31 // pred_fallthru
        _
    $region32: #{new_attention_forward.4} parent=5 // pred_fallthru
      _
    %p369 = scmp.le.s32.totalorder 1, %s14
    %p370 = scmp.lt.s32.totalorder %s14, 9
    %p371 = pnand %p369, %p370
    %p372 = pneg %p371
    // Predicated region
    $region49: #{new_attention_forward.4} parent=5 // pred_check
      _
    $region50: #{new_attention_forward.4} parent=5 // pred_check_branch
      %374 = sbr.rel (%p371) target = $region52
    $region51: #{new_attention_forward.4} parent=5 // pred_region
      %s375 = ssub.s32 %s14, 1
      %p376 = scmp.lt.s32.totalorder %s24, 7
      %s377 = scalar_select %p376, %s24, 7
      %p378 = scmp.lt.s32.totalorder %s25, 0
      %s379 = scalar_select %p378, %s25, 0
      %s380 = sadd.s32 %s379, %s377
      %s381 = smul.addr %s380, 8
      %s382 = scalar_lea.vmem %s0, %s381
      %p383 = pneg %p61
      %p384 = pneg %p58
      %p385 = scmp.lt.s32.totalorder %s24, 7
      %s386 = scalar_select %p385, %s24, 7
      %p387 = scmp.lt.s32.totalorder %s26, 0
      %s388 = scalar_select %p387, %s26, 0
      %s389 = sadd.s32 %s388, %s386
      %s390 = smul.addr %s389, 8
      %s391 = scalar_lea.vmem %s1, %s390
      %p392 = pneg %p89
      %p393 = pneg %p86
      %p394 = scmp.lt.s32.totalorder %s24, 7
      %s395 = scalar_select %p394, %s24, 7
      %p396 = scmp.lt.s32.totalorder %s26, 0
      %s397 = scalar_select %p396, %s26, 0
      %s398 = sadd.s32 %s397, %s395
      %s399 = smul.addr %s398, 8
      %s400 = scalar_lea.vmem %s2, %s399
      %p401 = pneg %p117
      %p402 = pneg %p114
      %p403 = scmp.lt.s32.totalorder %s25, 0
      %s404 = scalar_select %p403, %s25, 0
      %s405 = smul.addr %s404, 8
      %s406 = scalar_lea.vmem %s3, %s405
      %p407 = pneg %p143
      %p408 = pneg %p140
      %p409 = scmp.lt.s32.totalorder %s25, 0
      %s410 = scalar_select %p409, %s25, 0
      %s411 = smul.addr %s410, 8
      %s412 = scalar_lea.vmem %s4, %s411
      %p413 = pneg %p169
      %p414 = pneg %p166
      %p415 = scmp.lt.s32.totalorder %s26, 0
      %s416 = scalar_select %p415, %s26, 0
      %s417 = smul.addr %s416, 8
      %s418 = scalar_lea.vmem %s5, %s417
      %p419 = pneg %p195
      %p420 = pneg %p192
      %p421 = scmp.lt.s32.totalorder %s26, 0
      %s422 = scalar_select %p421, %s26, 0
      %s423 = smul.addr %s422, 8
      %s424 = scalar_lea.vmem %s6, %s423
      %p425 = pneg %p221
      %p426 = pneg %p218
      %p427 = scmp.lt.s32.totalorder %s24, 7
      %s428 = scalar_select %p427, %s24, 7
      %p429 = scmp.lt.s32.totalorder %s25, 0
      %s430 = scalar_select %p429, %s25, 0
      %p431 = scmp.lt.s32.totalorder %s26, 0
      %s432 = scalar_select %p431, %s26, 0
      %s433 = sadd.s32 %s432, %s430
      %s434 = sadd.s32 %s433, %s428
      %s435 = smul.addr %s434, 8
      %s436 = scalar_lea.vmem %s7, %s435
      %p437 = pneg %p251
      %p438 = pneg %p248
      %p439 = pneg %p279
      %p440 = pneg %p276
      %p441 = scmp.lt.s32.totalorder %s24, 7
      %s442 = scalar_select %p441, %s24, 7
      %p443 = scmp.lt.s32.totalorder %s25, 0
      %s444 = scalar_select %p443, %s25, 0
      %s445 = sadd.s32 %s444, %s442
      %s446 = smul.addr %s445, 8
      %s447 = scalar_lea.vmem %s8, %s446
      %p448 = scmp.lt.s32.totalorder %s24, 7
      %s449 = scalar_select %p448, %s24, 7
      %p450 = scmp.lt.s32.totalorder %s25, 0
      %s451 = scalar_select %p450, %s25, 0
      %s452 = sadd.s32 %s451, %s449
      %s453 = smul.addr %s452, 8
      %s454 = scalar_lea.vmem %s0, %s453
      %p455 = scmp.lt.s32.totalorder %s24, 7
      %s456 = scalar_select %p455, %s24, 7
      %p457 = scmp.lt.s32.totalorder %s26, 0
      %s458 = scalar_select %p457, %s26, 0
      %s459 = sadd.s32 %s458, %s456
      %s460 = smul.addr %s459, 8
      %s461 = scalar_lea.vmem %s1, %s460
      %p462 = scmp.lt.s32.totalorder %s24, 7
      %s463 = scalar_select %p462, %s24, 7
      %p464 = scmp.lt.s32.totalorder %s26, 0
      %s465 = scalar_select %p464, %s26, 0
      %s466 = sadd.s32 %s465, %s463
      %s467 = smul.addr %s466, 8
      %s468 = scalar_lea.vmem %s2, %s467
      %p469 = scmp.lt.s32.totalorder %s25, 0
      %s470 = scalar_select %p469, %s25, 0
      %s471 = smul.addr %s470, 8
      %s472 = scalar_lea.vmem %s3, %s471
      %p473 = scmp.lt.s32.totalorder %s25, 0
      %s474 = scalar_select %p473, %s25, 0
      %s475 = smul.addr %s474, 8
      %s476 = scalar_lea.vmem %s4, %s475
      %p477 = scmp.lt.s32.totalorder %s26, 0
      %s478 = scalar_select %p477, %s26, 0
      %s479 = smul.addr %s478, 8
      %s480 = scalar_lea.vmem %s5, %s479
      %p481 = scmp.lt.s32.totalorder %s26, 0
      %s482 = scalar_select %p481, %s26, 0
      %s483 = smul.addr %s482, 8
      %s484 = scalar_lea.vmem %s6, %s483
      %p485 = scmp.lt.s32.totalorder %s24, 7
      %s486 = scalar_select %p485, %s24, 7
      %p487 = scmp.lt.s32.totalorder %s25, 0
      %s488 = scalar_select %p487, %s25, 0
      %p489 = scmp.lt.s32.totalorder %s26, 0
      %s490 = scalar_select %p489, %s26, 0
      %s491 = sadd.s32 %s490, %s488
      %s492 = sadd.s32 %s491, %s486
      %s493 = smul.addr %s492, 8
      %s494 = scalar_lea.vmem %s7, %s493
      %p495 = scmp.lt.s32.totalorder %s24, 7
      %s496 = scalar_select %p495, %s24, 7
      %p497 = scmp.lt.s32.totalorder %s25, 0
      %s498 = scalar_select %p497, %s25, 0
      %s499 = sadd.s32 %s498, %s496
      %s500 = smul.addr %s499, 8
      %s501 = scalar_lea.vmem %s8, %s500
      %p502 = scmp.eq.s32.totalorder %s26, 0
      // Predicated region
      $region53: #{new_attention_forward.4} parent=51 // pred_check
        %p503 = pneg %p502
      $region54: #{new_attention_forward.4} parent=51 // pred_check_branch
        %505 = sbr.rel (%p503) target = $region56
      $region55: #{new_attention_forward.4} parent=51 // pred_region
        %vm506 = vcmask 7168
        %507 = vst.msk [vmem:[#allocation2] sm:$0xff] %vm506, -inf
        %508 = vst.msk [vmem:[#allocation3] sm:$0xff] %vm506, 0.0
        %vm509 = vcmask 261120
        %510 = vst.msk [vmem:[#allocation4] sm:$0xff] %vm509, 0.0
      $region56: #{new_attention_forward.4} parent=51 // pred_fallthru
        _
      %v511 = vld [vmem:[%s454] sm:$0xff]
      %v512 = vld [vmem:[%s472] sm:$0xff]
      %v513 = vld [vmem:[%s476] sm:$0xff]
      %v514 = vsub.f32 0.0, %v511
      %516 = vrot.lane.b32.xlu0 %v514, 112
      %v517 = vpop.permute.xlu0 %516
      %520 = vrot.lane.b32.xlu0 %v511, 16
      %v521 = vpop.permute.xlu0 %520
      %vm523 = vcmask 130048
      %v524 = vsel %vm523, %v517, %v521
      %v525 = vmul.f32 %v511, %v512
      %v526 = vmul.f32 %v524, %v513
      %v527 = vadd.f32 %v525, %v526
      %v528 = vld [vmem:[%s461] sm:$0xff]
      %v529 = vld [vmem:[%s480] sm:$0xff]
      %v530 = vld [vmem:[%s484] sm:$0xff]
      %v531 = vsub.f32 0.0, %v528
      %533 = vrot.lane.b32.xlu0 %v531, 112
      %v534 = vpop.permute.xlu0 %533
      %537 = vrot.lane.b32.xlu0 %v528, 16
      %v538 = vpop.permute.xlu0 %537
      %v540 = vsel %vm523, %v534, %v538
      %v541 = vmul.f32 %v528, %v529
      %v542 = vmul.f32 %v540, %v530
      %v543 = vadd.f32 %v541, %v542
      %v544 = vld [vmem:[%s468] sm:$0xff]
      %vm545 = vcmask 261120
      %v547 = vsel %vm545, %v527, 0
      %v550 = vsel %vm545, %v543, 0
      %552 = vmatprep.subr.mxu0 0.0
      %553 = vmatpush1.xpose.msra.mxu0 %v550
      %554 = vmatprep.subr.mxu0 0.0
      %555 = vmatpush1.xpose.msra.mxu0 0.0
      %556 = vmatprep.subr.mxu0 0.0
      %557 = vmatpush1.xpose.msra.mxu0 0.0
      %558 = vmatprep.subr.mxu0 0.0
      %559 = vmatpush1.xpose.msra.mxu0 0.0
      %560 = vmatprep.subr.mxu0 0.0
      %561 = vmatpush1.xpose.msra.mxu0 0.0
      %562 = vmatprep.subr.mxu0 0.0
      %563 = vmatpush1.xpose.msra.mxu0 0.0
      %564 = vmatprep.subr.mxu0 0.0
      %565 = vmatpush1.xpose.msra.mxu0 0.0
      %566 = vmatprep.subr.mxu0 0.0
      %567 = vmatpush1.xpose.msra.mxu0 0.0
      %568 = vmatprep.subr.mxu0 0.0
      %569 = vmatpush1.xpose.msra.mxu0 0.0
      %570 = vmatprep.subr.mxu0 0.0
      %571 = vmatpush1.xpose.msra.mxu0 0.0
      %572 = vmatprep.subr.mxu0 0.0
      %573 = vmatpush1.xpose.msra.mxu0 0.0
      %574 = vmatprep.subr.mxu0 0.0
      %575 = vmatpush1.xpose.msra.mxu0 0.0
      %576 = vmatprep.subr.mxu0 0.0
      %577 = vmatpush1.xpose.msra.mxu0 0.0
      %578 = vmatprep.subr.mxu0 0.0
      %579 = vmatpush1.xpose.msra.mxu0 0.0
      %580 = vmatprep.subr.mxu0 0.0
      %581 = vmatpush1.xpose.msra.mxu0 0.0
      %582 = vmatprep.subr.mxu0 0.0
      %583 = vmatpush1.xpose.msra.mxu0 0.0
      %584 = vmatprep.subr.mxu0 0.0
      %585 = vmatpush1.xpose.msra.mxu0 0.0
      %586 = vmatprep.subr.mxu0 0.0
      %587 = vmatpush1.xpose.msra.mxu0 0.0
      %588 = vmatprep.subr.mxu0 0.0
      %589 = vmatpush1.xpose.msra.mxu0 0.0
      %590 = vmatprep.subr.mxu0 0.0
      %591 = vmatpush1.xpose.msra.mxu0 0.0
      %592 = vmatprep.subr.mxu0 0.0
      %593 = vmatpush1.xpose.msra.mxu0 0.0
      %594 = vmatprep.subr.mxu0 0.0
      %595 = vmatpush1.xpose.msra.mxu0 0.0
      %596 = vmatprep.subr.mxu0 0.0
      %597 = vmatpush1.xpose.msra.mxu0 0.0
      %598 = vmatprep.subr.mxu0 0.0
      %599 = vmatpush1.xpose.msra.mxu0 0.0
      %600 = vmatprep.subr.mxu0 0.0
      %601 = vmatpush1.xpose.msra.mxu0 0.0
      %602 = vmatprep.subr.mxu0 0.0
      %603 = vmatpush1.xpose.msra.mxu0 0.0
      %604 = vmatprep.subr.mxu0 0.0
      %605 = vmatpush1.xpose.msra.mxu0 0.0
      %606 = vmatprep.subr.mxu0 0.0
      %607 = vmatpush1.xpose.msra.mxu0 0.0
      %608 = vmatprep.subr.mxu0 0.0
      %609 = vmatpush1.xpose.msra.mxu0 0.0
      %610 = vmatprep.subr.mxu0 0.0
      %611 = vmatpush1.xpose.msra.mxu0 0.0
      %612 = vmatprep.subr.mxu0 0.0
      %613 = vmatpush1.xpose.msra.mxu0 0.0
      %614 = vmatprep.subr.mxu0 0.0
      %615 = vmatpush1.xpose.msra.mxu0 0.0
      %616 = vmatprep.mubr.f32.mxu0 0.0
      %617 = vmatmul.mubr.f32.gmra.mrb[0].mxu0 %v547
      %v618 = vpop.f32.mrb[0].mxu0
      %v619 = vadd.f32 0.0, %v618
      %v620 = vpop.f32.mrb[0].mxu0
      %621 = vdwg.mxu0
      %v622 = vmul.f32 %v619, 0.17677669
      %v623 = vld [vmem:[%s494] sm:$0xff]
      %v624 = vadd.f32 %v622, %v623
      %v625 = vld [vmem:[#allocation2] sm:$0xff]
      %vm626 = vcmask 64512
      %v627 = vsel %vm626, %v624, -inf
      %628 = vmax.xlane.f32.xlu0 %v627
      %v629 = vpop.xlane.xlu0 %628
      %v630 = vmax.f32 %v625, %v629
      %v631 = vsub.f32 %v625, %v630
      %v632 = vmul.f32 %v631, 1.442695
      %v633 = vpow.pop %v632
      %635 = vset.pattern.permute.xlu0 0
      %636 = vperm.xlu0 %635, %v630
      %v637 = vpop.permute.xlu0 %636
      %v639 = vsub.f32 %v624, %v637
      %v640 = vmul.f32 %v639, 1.442695
      %v641 = vpow.pop %v640
      %v642 = vld [vmem:[#allocation3] sm:$0xff]
      %v643 = vmul.f32 %v633, %v642
      %v644 = vsel %vm626, %v641, 0.0
      %645 = vadd.xlane.f32.xlu0 %v644
      %v646 = vpop.xlane.xlu0 %645
      %v647 = vadd.f32 %v643, %v646
      %vm648 = vcmask 7168
      %649 = vst.msk [vmem:[#allocation3] sm:$0xff] %vm648, %v647
      %v650 = vld [vmem:[#allocation4] sm:$0xff]
      %652 = vset.pattern.permute.xlu0 0
      %653 = vperm.xlu0 %652, %v633
      %v654 = vpop.permute.xlu0 %653
      %v656 = vmul.f32 %v654, %v650
      %v658 = vsel %vm626, %v641, 0
      %660 = vmatprep.subr.mxu0 0.0
      %661 = vmatpush1.msra.mxu0 %v544
      %662 = vmatprep.subr.mxu0 0.0
      %663 = vmatpush1.msra.mxu0 0.0
      %664 = vmatprep.subr.mxu0 0.0
      %665 = vmatpush1.msra.mxu0 0.0
      %666 = vmatprep.subr.mxu0 0.0
      %667 = vmatpush1.msra.mxu0 0.0
      %668 = vmatprep.subr.mxu0 0.0
      %669 = vmatpush1.msra.mxu0 0.0
      %670 = vmatprep.subr.mxu0 0.0
      %671 = vmatpush1.msra.mxu0 0.0
      %672 = vmatprep.subr.mxu0 0.0
      %673 = vmatpush1.msra.mxu0 0.0
      %674 = vmatprep.subr.mxu0 0.0
      %675 = vmatpush1.msra.mxu0 0.0
      %676 = vmatprep.subr.mxu0 0.0
      %677 = vmatpush1.msra.mxu0 0.0
      %678 = vmatprep.subr.mxu0 0.0
      %679 = vmatpush1.msra.mxu0 0.0
      %680 = vmatprep.subr.mxu0 0.0
      %681 = vmatpush1.msra.mxu0 0.0
      %682 = vmatprep.subr.mxu0 0.0
      %683 = vmatpush1.msra.mxu0 0.0
      %684 = vmatprep.subr.mxu0 0.0
      %685 = vmatpush1.msra.mxu0 0.0
      %686 = vmatprep.subr.mxu0 0.0
      %687 = vmatpush1.msra.mxu0 0.0
      %688 = vmatprep.subr.mxu0 0.0
      %689 = vmatpush1.msra.mxu0 0.0
      %690 = vmatprep.subr.mxu0 0.0
      %691 = vmatpush1.msra.mxu0 0.0
      %692 = vmatprep.subr.mxu0 0.0
      %693 = vmatpush1.msra.mxu0 0.0
      %694 = vmatprep.subr.mxu0 0.0
      %695 = vmatpush1.msra.mxu0 0.0
      %696 = vmatprep.subr.mxu0 0.0
      %697 = vmatpush1.msra.mxu0 0.0
      %698 = vmatprep.subr.mxu0 0.0
      %699 = vmatpush1.msra.mxu0 0.0
      %700 = vmatprep.subr.mxu0 0.0
      %701 = vmatpush1.msra.mxu0 0.0
      %702 = vmatprep.subr.mxu0 0.0
      %703 = vmatpush1.msra.mxu0 0.0
      %704 = vmatprep.subr.mxu0 0.0
      %705 = vmatpush1.msra.mxu0 0.0
      %706 = vmatprep.subr.mxu0 0.0
      %707 = vmatpush1.msra.mxu0 0.0
      %708 = vmatprep.subr.mxu0 0.0
      %709 = vmatpush1.msra.mxu0 0.0
      %710 = vmatprep.subr.mxu0 0.0
      %711 = vmatpush1.msra.mxu0 0.0
      %712 = vmatprep.subr.mxu0 0.0
      %713 = vmatpush1.msra.mxu0 0.0
      %714 = vmatprep.subr.mxu0 0.0
      %715 = vmatpush1.msra.mxu0 0.0
      %716 = vmatprep.subr.mxu0 0.0
      %717 = vmatpush1.msra.mxu0 0.0
      %718 = vmatprep.subr.mxu0 0.0
      %719 = vmatpush1.msra.mxu0 0.0
      %720 = vmatprep.subr.mxu0 0.0
      %721 = vmatpush1.msra.mxu0 0.0
      %722 = vmatprep.subr.mxu0 0.0
      %723 = vmatpush1.msra.mxu0 0.0
      %724 = vmatprep.mubr.f32.mxu0 0.0
      %725 = vmatmul.mubr.f32.gmra.mrb[0].mxu0 %v658
      %v726 = vpop.f32.mrb[0].mxu0
      %v727 = vadd.f32 0.0, %v726
      %v728 = vpop.f32.mrb[0].mxu0
      %729 = vdwg.mxu0
      %v730 = vadd.f32 %v656, %v727
      %731 = vst.msk [vmem:[#allocation4] sm:$0xff] %vm545, %v730
      %732 = vst.msk [vmem:[#allocation2] sm:$0xff] %vm648, %v630
      // Predicated region
      $region57: #{new_attention_forward.4} parent=51 // pred_check
        %p733 = pneg %p502
      $region58: #{new_attention_forward.4} parent=51 // pred_check_branch
        %735 = sbr.rel (%p733) target = $region60
      $region59: #{new_attention_forward.4} parent=51 // pred_region
        %v736 = vld [vmem:[#allocation4] sm:$0xff]
        %v737 = vld [vmem:[#allocation3] sm:$0xff]
        %739 = vset.pattern.permute.xlu0 0
        %740 = vperm.xlu0 %739, %v737
        %v741 = vpop.permute.xlu0 %740
        %v743 = vrcp.pop %v741
        %v744 = vmul.f32 %v736, %v743
        %745 = vst.msk [vmem:[%s501] sm:$0xff] %vm545, %v744
      $region60: #{new_attention_forward.4} parent=51 // pred_fallthru
        _
      %p746 = scmp.lt.s32.totalorder %s24, 7
      %s747 = scalar_select %p746, %s24, 7
      %p748 = scmp.lt.s32.totalorder %s25, 0
      %s749 = scalar_select %p748, %s25, 0
      %s750 = sadd.s32 %s749, %s747
      %s751 = smul.addr %s750, 8
      %s752 = scalar_lea.vmem %s8, %s751
      // Predicated region
      $region61: #{new_attention_forward.4} parent=51 // pred_check
        %p753 = pneg %p276
      $region62: #{new_attention_forward.4} parent=51 // pred_check_branch
        %755 = sbr.rel (%p753) target = $region64
      $region63: #{new_attention_forward.4} parent=51 // pred_region
        _
      $region64: #{new_attention_forward.4} parent=51 // pred_fallthru
        _
    $region52: #{new_attention_forward.4} parent=5 // pred_fallthru
      _
    %p756 = scmp.le.s32.totalorder 2, %s14
    // Predicated region
    $region65: #{new_attention_forward.4} parent=5 // pred_check
      %p757 = pneg %p756
    $region66: #{new_attention_forward.4} parent=5 // pred_check_branch
      %759 = sbr.rel (%p757) target = $region68
    $region67: #{new_attention_forward.4} parent=5 // pred_region
      %s760 = ssub.s32 %s14, 2
      // Predicated region
      $region69: #{new_attention_forward.4} parent=67 // pred_check
        %p761 = pneg %p282
      $region70: #{new_attention_forward.4} parent=67 // pred_check_branch
        %763 = sbr.rel (%p761) target = $region72
      $region71: #{new_attention_forward.4} parent=67 // pred_region
        %p764 = scmp.lt.s32.totalorder %s27, 7
        %s765 = scalar_select %p764, %s27, 7
        %p766 = scmp.lt.s32.totalorder %s28, 0
        %s767 = scalar_select %p766, %s28, 0
        %s768 = sadd.s32 %s767, %s765
        %s769 = smul.addr %s768, 8
        %s770 = scalar_lea.vmem %s8, %s769
      $region72: #{new_attention_forward.4} parent=67 // pred_fallthru
        _
    $region68: #{new_attention_forward.4} parent=5 // pred_fallthru
      _
  $region6: #{new_attention_forward.4} parent=0 // loop_footer
    %s18 = sadd.s32 1, %s14
  $region7: #{new_attention_forward.4} parent=0 // loop_footer_branch
    %13 = sbr.rel target = $region3
  $region8: #{new_attention_forward.4} parent=0 // loop_exit
    _

</llo_original>
